<compile_context>
chip_gen: v7x
topology: tpu7x:2x2x1
jax: 0.10.0
libtpu: 0.0.40
codegen_flags: <defaults>
</compile_context>

<pallas_src>
import functools

import jax
import jax.numpy as jnp
import numpy as np
from jax import lax
from jax.experimental import pallas as pl
from jax.experimental.pallas import tpu as pltpu


# ----------------------------------------------------------------------------
# Fused SIU kernel: per image, channels on sublanes, H*W on lanes.
# ----------------------------------------------------------------------------
def _siu_kernel(w7_ref, wx_ref, bx_ref, wy_ref, by_ref, x_ref, y_ref,
                out_ref, pad_ref, *, H, W, K):
    HW = H * W
    P = (K - 1) // 2
    OFS = P * W + P            # max |dy*W + dx| reach of the 7x7 stencil
    PADW = HW + 2 * OFS

    x = x_ref[0]               # (Cin, HW)  lane-dense
    y = y_ref[0]               # (Cin, HW)

    # ---- 1x1 conv + folded BN + channel max, both branches (MXU + XLU) ----
    zx = jnp.dot(wx_ref[...], x, preferred_element_type=jnp.float32) + bx_ref[...]
    zy = jnp.dot(wy_ref[...], y, preferred_element_type=jnp.float32) + by_ref[...]
    xp = jnp.max(zx, axis=0, keepdims=True)      # (1, HW)
    yp = jnp.max(zy, axis=0, keepdims=True)      # (1, HW)

    # ---- stage flat pooled maps in a zero-bordered VMEM scratch ------------
    pad_ref[...] = jnp.zeros((2, PADW), jnp.float32)
    pad_ref[0:1, OFS:OFS + HW] = xp
    pad_ref[1:2, OFS:OFS + HW] = yp

    # ---- 7x7 cross-correlation in the flat domain --------------------------
    # out[i] = sum_{ky,kx} w[c,ky,kx] * pooled_c[i + (ky-P)*W + (kx-P)]
    # Row out-of-range taps read the zero border; column wrap is masked.
    lane = lax.broadcasted_iota(jnp.int32, (1, HW), 1)
    col = lane % W

    acc = jnp.zeros((1, HW), jnp.float32)
    for kx in range(K):                          # 7 independent partial chains
        dx = kx - P
        part = jnp.zeros((1, HW), jnp.float32)
        for ky in range(K):
            dy = ky - P
            off = OFS + dy * W + dx              # static lane offset
            xs = pad_ref[0:1, off:off + HW]
            ys = pad_ref[1:2, off:off + HW]
            part = part + w7_ref[ky * K + kx] * xs \
                        + w7_ref[K * K + ky * K + kx] * ys
        if dx != 0:
            cmask = jnp.logical_and(col + dx >= 0, col + dx < W)
            part = part * cmask.astype(jnp.float32)
        acc = acc + part

    pool = jax.nn.sigmoid(acc)                   # (1, HW)

    # ---- gate: pool * (X + Y), broadcast over channels, lane-dense store ---
    out_ref[0] = pool * (x + y)


# ----------------------------------------------------------------------------
# Parameter setup (deterministic, synthetic), BN folding and SIU forward
# ----------------------------------------------------------------------------
def init_params(key, in_channels, out_channels):
    ks = jax.random.split(key, 13)

    def branch(k0, k1, k2, k3, k4, k5):
        return dict(
            conv_w=0.1 * jax.random.normal(k0, (out_channels, in_channels, 1, 1), jnp.float32),
            conv_b=0.1 * jax.random.normal(k1, (out_channels,), jnp.float32),
            bn_gamma=1.0 + 0.1 * jax.random.normal(k2, (out_channels,), jnp.float32),
            bn_beta=0.1 * jax.random.normal(k3, (out_channels,), jnp.float32),
            bn_mean=0.1 * jax.random.normal(k4, (out_channels,), jnp.float32),
            bn_var=jnp.abs(1.0 + 0.1 * jax.random.normal(k5, (out_channels,), jnp.float32)),
        )

    return dict(
        x_branch=branch(*ks[0:6]),
        y_branch=branch(*ks[6:12]),
        conv7_w=0.05 * jax.random.normal(ks[12], (1, 2, 7, 7), jnp.float32),
    )


def _fold_bn(p, eps=1e-5):
    w = p["conv_w"][:, :, 0, 0]                          # (Cout, Cin)
    scale = p["bn_gamma"] / jnp.sqrt(p["bn_var"] + eps)  # (Cout,)
    w_fold = w * scale[:, None]                          # (Cout, Cin)
    b_fold = (p["conv_b"] - p["bn_mean"]) * scale + p["bn_beta"]
    return w_fold, b_fold


def siu_forward(X, Y, params):
    """X, Y: NCHW float32 -> NCHW float32 (same shape as X)."""
    N, Cin, H, W = X.shape
    HW = H * W
    K = 7
    P = (K - 1) // 2
    OFS = P * W + P
    PADW = HW + 2 * OFS

    wx, bx = _fold_bn(params["x_branch"])
    wy, by = _fold_bn(params["y_branch"])
    Cout = wx.shape[0]
    w7 = params["conv7_w"].reshape(-1).astype(jnp.float32)   # (2*K*K,), [c, ky, kx]

    # Free reshapes (no HBM transpose passes): NCHW -> (N, Cin, H*W).
    x = X.reshape(N, Cin, HW)
    y = Y.reshape(N, Cin, HW)

    kernel = functools.partial(_siu_kernel, H=H, W=W, K=K)
    out = pl.pallas_call(
        kernel,
        out_shape=jax.ShapeDtypeStruct((N, Cin, HW), jnp.float32),
        grid=(N,),
        in_specs=[
            pl.BlockSpec(memory_space=pltpu.MemorySpace.SMEM),       # 7x7 weights
            pl.BlockSpec((Cout, Cin), lambda n: (0, 0)),             # X-branch W
            pl.BlockSpec((Cout, 1), lambda n: (0, 0)),               # X-branch b
            pl.BlockSpec((Cout, Cin), lambda n: (0, 0)),             # Y-branch W
            pl.BlockSpec((Cout, 1), lambda n: (0, 0)),               # Y-branch b
            pl.BlockSpec((1, Cin, HW), lambda n: (n, 0, 0)),         # X
            pl.BlockSpec((1, Cin, HW), lambda n: (n, 0, 0)),         # Y
        ],
        out_specs=pl.BlockSpec((1, Cin, HW), lambda n: (n, 0, 0)),
        scratch_shapes=[pltpu.VMEM((2, PADW), jnp.float32)],
        compiler_params=pltpu.CompilerParams(dimension_semantics=("parallel",)),
    )(w7, wx, bx.reshape(Cout, 1), wy, by.reshape(Cout, 1), x, y)
    return out.reshape(N, Cin, H, W)


# ----------------------------------------------------------------------------
# Pure-JAX reference (for correctness check only)
# ----------------------------------------------------------------------------
def siu_reference(X, Y, params, eps=1e-5):
    def branch(x, p):
        w = p["conv_w"][:, :, 0, 0]
        z = jnp.einsum("nchw,oc->nohw", x, w) + p["conv_b"][None, :, None, None]
        z = (z - p["bn_mean"][None, :, None, None]) / jnp.sqrt(
            p["bn_var"][None, :, None, None] + eps)
        z = z * p["bn_gamma"][None, :, None, None] + p["bn_beta"][None, :, None, None]
        return jnp.max(z, axis=1, keepdims=True)

    xp = branch(X, params["x_branch"])
    yp = branch(Y, params["y_branch"])
    pool = jnp.concatenate([xp, yp], axis=1)                       # (N,2,H,W)
    pool = lax.conv_general_dilated(pool, params["conv7_w"], (1, 1), "SAME")
    pool = jax.nn.sigmoid(pool)
    return pool * X + pool * Y


if __name__ == "__main__":
    N, Cin, Cout, H, W = 2, 4, 8, 16, 16
    key = jax.random.PRNGKey(0)
    kx, ky, kp = jax.random.split(key, 3)
    X = jax.random.normal(kx, (N, Cin, H, W), jnp.float32)
    Y = jax.random.normal(ky, (N, Cin, H, W), jnp.float32)
    params = init_params(kp, Cin, Cout)

    out = jax.block_until_ready(siu_forward(X, Y, params))
    ref = siu_reference(X, Y, params)

    assert out.shape == (N, Cin, H, W) and out.dtype == jnp.float32
    np.testing.assert_allclose(np.asarray(out), np.asarray(ref), rtol=1e-4, atol=1e-4)
    print("KERNEL_OK")
</pallas_src>

<mosaic_0001>
module attributes {stable_mosaic.version = 11 : i64} {
  func.func @_siu_kernel(%arg0: i32, %arg1: memref<98xf32, #tpu.memory_space<smem>>, %arg2: memref<8x4xf32, #tpu.memory_space<vmem>>, %arg3: memref<8x1xf32, #tpu.memory_space<vmem>>, %arg4: memref<8x4xf32, #tpu.memory_space<vmem>>, %arg5: memref<8x1xf32, #tpu.memory_space<vmem>>, %arg6: memref<1x4x256xf32, #tpu.memory_space<vmem>>, %arg7: memref<1x4x256xf32, #tpu.memory_space<vmem>>, %arg8: memref<1x4x256xf32, #tpu.memory_space<vmem>>, %arg9: memref<2x358xf32, #tpu.memory_space<vmem>>) attributes {dimension_semantics = [#tpu.dimension_semantics<parallel>], iteration_bounds = array<i64: 2>, scalar_prefetch = 0 : i64, scratch_operands = 1 : i64, tpu.core_type = #tpu.core_type<tc>, window_params = [{transform_indices = @transform_0, window_bounds = array<i64: 98>}, {pipeline_mode = #tpu.pipeline_mode<synchronous>, transform_indices = @transform_1, window_bounds = array<i64: 8, 4>}, {pipeline_mode = #tpu.pipeline_mode<synchronous>, transform_indices = @transform_2, window_bounds = array<i64: 8, 1>}, {pipeline_mode = #tpu.pipeline_mode<synchronous>, transform_indices = @transform_3, window_bounds = array<i64: 8, 4>}, {pipeline_mode = #tpu.pipeline_mode<synchronous>, transform_indices = @transform_4, window_bounds = array<i64: 8, 1>}, {transform_indices = @transform_5, window_bounds = array<i64: 1, 4, 256>}, {transform_indices = @transform_6, window_bounds = array<i64: 1, 4, 256>}, {transform_indices = @transform_7, window_bounds = array<i64: 1, 4, 256>}]} {
    %c0 = arith.constant 0 : index
    %c0_0 = arith.constant 0 : index
    %c0_1 = arith.constant 0 : index
    %0 = vector.load %arg6[%c0, %c0_0, %c0_1] : memref<1x4x256xf32, #tpu.memory_space<vmem>>, vector<1x4x256xf32>
    %1 = vector.shape_cast %0 : vector<1x4x256xf32> to vector<4x256xf32>
    %c0_2 = arith.constant 0 : index
    %c0_3 = arith.constant 0 : index
    %c0_4 = arith.constant 0 : index
    %2 = vector.load %arg7[%c0_2, %c0_3, %c0_4] : memref<1x4x256xf32, #tpu.memory_space<vmem>>, vector<1x4x256xf32>
    %3 = vector.shape_cast %2 : vector<1x4x256xf32> to vector<4x256xf32>
    %c0_5 = arith.constant 0 : index
    %c0_6 = arith.constant 0 : index
    %4 = vector.load %arg2[%c0_5, %c0_6] : memref<8x4xf32, #tpu.memory_space<vmem>>, vector<8x4xf32>
    %cst = arith.constant dense<0.000000e+00> : vector<8x256xf32>
    %5 = tpu.matmul %4, %1, %cst {dimension_numbers = #tpu.dot_dimension_numbers<[1], [0], [0], [1], [0, 0, 1, 1], [], []>} : vector<8x4xf32>, vector<4x256xf32>, vector<8x256xf32> -> vector<8x256xf32>
    %c0_7 = arith.constant 0 : index
    %c0_8 = arith.constant 0 : index
    %6 = vector.load %arg3[%c0_7, %c0_8] : memref<8x1xf32, #tpu.memory_space<vmem>>, vector<8x1xf32>
    %7 = vector.broadcast %6 : vector<8x1xf32> to vector<8x256xf32>
    %8 = arith.addf %5, %7 : vector<8x256xf32>
    %c0_9 = arith.constant 0 : index
    %c0_10 = arith.constant 0 : index
    %9 = vector.load %arg4[%c0_9, %c0_10] : memref<8x4xf32, #tpu.memory_space<vmem>>, vector<8x4xf32>
    %cst_11 = arith.constant dense<0.000000e+00> : vector<8x256xf32>
    %10 = tpu.matmul %9, %3, %cst_11 {dimension_numbers = #tpu.dot_dimension_numbers<[1], [0], [0], [1], [0, 0, 1, 1], [], []>} : vector<8x4xf32>, vector<4x256xf32>, vector<8x256xf32> -> vector<8x256xf32>
    %c0_12 = arith.constant 0 : index
    %c0_13 = arith.constant 0 : index
    %11 = vector.load %arg5[%c0_12, %c0_13] : memref<8x1xf32, #tpu.memory_space<vmem>>, vector<8x1xf32>
    %12 = vector.broadcast %11 : vector<8x1xf32> to vector<8x256xf32>
    %13 = arith.addf %10, %12 : vector<8x256xf32>
    %cst_14 = arith.constant dense<0xFF800000> : vector<256xf32>
    %14 = vector.multi_reduction <maximumf>, %8, %cst_14 [0] : vector<8x256xf32> to vector<256xf32>
    %15 = vector.shape_cast %14 : vector<256xf32> to vector<1x256xf32>
    %cst_15 = arith.constant dense<0xFF800000> : vector<256xf32>
    %16 = vector.multi_reduction <maximumf>, %13, %cst_15 [0] : vector<8x256xf32> to vector<256xf32>
    %17 = vector.shape_cast %16 : vector<256xf32> to vector<1x256xf32>
    %cst_16 = arith.constant 0.000000e+00 : f32
    %18 = vector.broadcast %cst_16 : f32 to vector<2x358xf32>
    %c0_17 = arith.constant 0 : index
    %c0_18 = arith.constant 0 : index
    %19 = vector.load %arg9[%c0_17, %c0_18] : memref<2x358xf32, #tpu.memory_space<vmem>>, vector<2x358xf32>
    tpu.vector_store %arg9[%c0_17, %c0_18], %18 {strides = array<i32>} : memref<2x358xf32, #tpu.memory_space<vmem>>, vector<2x358xf32>,
    %c0_19 = arith.constant 0 : index
    %c51 = arith.constant 51 : index
    %20 = vector.load %arg9[%c0_19, %c51] : memref<2x358xf32, #tpu.memory_space<vmem>>, vector<1x256xf32>
    tpu.vector_store %arg9[%c0_19, %c51], %15 {strides = array<i32>} : memref<2x358xf32, #tpu.memory_space<vmem>>, vector<1x256xf32>,
    %c1 = arith.constant 1 : index
    %c51_20 = arith.constant 51 : index
    %21 = vector.load %arg9[%c1, %c51_20] : memref<2x358xf32, #tpu.memory_space<vmem>>, vector<1x256xf32>
    tpu.vector_store %arg9[%c1, %c51_20], %17 {strides = array<i32>} : memref<2x358xf32, #tpu.memory_space<vmem>>, vector<1x256xf32>,
    %22 = tpu.iota {dimensions = array<i32: 1>} : vector<1x256xi32>
    %c16_i32 = arith.constant 16 : i32
    %c0_i32 = arith.constant 0 : i32
    %23 = arith.cmpi eq, %c16_i32, %c0_i32 : i32
    %c1_i32 = arith.constant 1 : i32
    %24 = arith.select %23, %c1_i32, %c16_i32 : i32
    %25 = vector.broadcast %24 : i32 to vector<1x256xi32>
    %26 = arith.remsi %22, %25 : vector<1x256xi32>
    %c0_i32_21 = arith.constant 0 : i32
    %27 = vector.broadcast %c0_i32_21 : i32 to vector<1x256xi32>
    %28 = arith.cmpi ne, %26, %27 : vector<1x256xi32>
    %c0_i32_22 = arith.constant 0 : i32
    %29 = vector.broadcast %c0_i32_22 : i32 to vector<1x256xi32>
    %30 = arith.cmpi slt, %26, %29 : vector<1x256xi32>
    %c0_i32_23 = arith.constant 0 : i32
    %31 = arith.cmpi slt, %24, %c0_i32_23 : i32
    %32 = vector.broadcast %31 : i1 to vector<1x256xi1>
    %33 = vector.broadcast %32 : vector<1x256xi1> to vector<1x256xi1>
    %34 = arith.xori %30, %33 : vector<1x256xi1>
    %35 = arith.andi %34, %28 : vector<1x256xi1>
    %36 = vector.broadcast %24 : i32 to vector<1x256xi32>
    %37 = arith.addi %26, %36 : vector<1x256xi32>
    %38 = arith.select %35, %37, %26 : vector<1x256xi1>, vector<1x256xi32>
    %cst_24 = arith.constant 0.000000e+00 : f32
    %39 = vector.broadcast %cst_24 : f32 to vector<1x256xf32>
    %cst_25 = arith.constant 0.000000e+00 : f32
    %40 = vector.broadcast %cst_25 : f32 to vector<1x256xf32>
    %c0_26 = arith.constant 0 : index
    %c0_27 = arith.constant 0 : index
    %41 = vector.load %arg9[%c0_26, %c0_27] : memref<2x358xf32, #tpu.memory_space<vmem>>, vector<1x256xf32>
    %c1_28 = arith.constant 1 : index
    %c0_29 = arith.constant 0 : index
    %42 = vector.load %arg9[%c1_28, %c0_29] : memref<2x358xf32, #tpu.memory_space<vmem>>, vector<1x256xf32>
    %c0_30 = arith.constant 0 : index
    %43 = memref.load %arg1[%c0_30] : memref<98xf32, #tpu.memory_space<smem>>
    %44 = vector.broadcast %43 : f32 to vector<1x256xf32>
    %45 = arith.mulf %44, %41 : vector<1x256xf32>
    %46 = arith.addf %40, %45 : vector<1x256xf32>
    %c49 = arith.constant 49 : index
    %47 = memref.load %arg1[%c49] : memref<98xf32, #tpu.memory_space<smem>>
    %48 = vector.broadcast %47 : f32 to vector<1x256xf32>
    %49 = arith.mulf %48, %42 : vector<1x256xf32>
    %50 = arith.addf %46, %49 : vector<1x256xf32>
    %c0_31 = arith.constant 0 : index
    %c16 = arith.constant 16 : index
    %51 = vector.load %arg9[%c0_31, %c16] : memref<2x358xf32, #tpu.memory_space<vmem>>, vector<1x256xf32>
    %c1_32 = arith.constant 1 : index
    %c16_33 = arith.constant 16 : index
    %52 = vector.load %arg9[%c1_32, %c16_33] : memref<2x358xf32, #tpu.memory_space<vmem>>, vector<1x256xf32>
    %c7 = arith.constant 7 : index
    %53 = memref.load %arg1[%c7] : memref<98xf32, #tpu.memory_space<smem>>
    %54 = vector.broadcast %53 : f32 to vector<1x256xf32>
    %55 = arith.mulf %54, %51 : vector<1x256xf32>
    %56 = arith.addf %50, %55 : vector<1x256xf32>
    %c56 = arith.constant 56 : index
    %57 = memref.load %arg1[%c56] : memref<98xf32, #tpu.memory_space<smem>>
    %58 = vector.broadcast %57 : f32 to vector<1x256xf32>
    %59 = arith.mulf %58, %52 : vector<1x256xf32>
    %60 = arith.addf %56, %59 : vector<1x256xf32>
    %c0_34 = arith.constant 0 : index
    %c32 = arith.constant 32 : index
    %61 = vector.load %arg9[%c0_34, %c32] : memref<2x358xf32, #tpu.memory_space<vmem>>, vector<1x256xf32>
    %c1_35 = arith.constant 1 : index
    %c32_36 = arith.constant 32 : index
    %62 = vector.load %arg9[%c1_35, %c32_36] : memref<2x358xf32, #tpu.memory_space<vmem>>, vector<1x256xf32>
    %c14 = arith.constant 14 : index
    %63 = memref.load %arg1[%c14] : memref<98xf32, #tpu.memory_space<smem>>
    %64 = vector.broadcast %63 : f32 to vector<1x256xf32>
    %65 = arith.mulf %64, %61 : vector<1x256xf32>
    %66 = arith.addf %60, %65 : vector<1x256xf32>
    %c63 = arith.constant 63 : index
    %67 = memref.load %arg1[%c63] : memref<98xf32, #tpu.memory_space<smem>>
    %68 = vector.broadcast %67 : f32 to vector<1x256xf32>
    %69 = arith.mulf %68, %62 : vector<1x256xf32>
    %70 = arith.addf %66, %69 : vector<1x256xf32>
    %c0_37 = arith.constant 0 : index
    %c48 = arith.constant 48 : index
    %71 = vector.load %arg9[%c0_37, %c48] : memref<2x358xf32, #tpu.memory_space<vmem>>, vector<1x256xf32>
    %c1_38 = arith.constant 1 : index
    %c48_39 = arith.constant 48 : index
    %72 = vector.load %arg9[%c1_38, %c48_39] : memref<2x358xf32, #tpu.memory_space<vmem>>, vector<1x256xf32>
    %c21 = arith.constant 21 : index
    %73 = memref.load %arg1[%c21] : memref<98xf32, #tpu.memory_space<smem>>
    %74 = vector.broadcast %73 : f32 to vector<1x256xf32>
    %75 = arith.mulf %74, %71 : vector<1x256xf32>
    %76 = arith.addf %70, %75 : vector<1x256xf32>
    %c70 = arith.constant 70 : index
    %77 = memref.load %arg1[%c70] : memref<98xf32, #tpu.memory_space<smem>>
    %78 = vector.broadcast %77 : f32 to vector<1x256xf32>
    %79 = arith.mulf %78, %72 : vector<1x256xf32>
    %80 = arith.addf %76, %79 : vector<1x256xf32>
    %c0_40 = arith.constant 0 : index
    %c64 = arith.constant 64 : index
    %81 = vector.load %arg9[%c0_40, %c64] : memref<2x358xf32, #tpu.memory_space<vmem>>, vector<1x256xf32>
    %c1_41 = arith.constant 1 : index
    %c64_42 = arith.constant 64 : index
    %82 = vector.load %arg9[%c1_41, %c64_42] : memref<2x358xf32, #tpu.memory_space<vmem>>, vector<1x256xf32>
    %c28 = arith.constant 28 : index
    %83 = memref.load %arg1[%c28] : memref<98xf32, #tpu.memory_space<smem>>
    %84 = vector.broadcast %83 : f32 to vector<1x256xf32>
    %85 = arith.mulf %84, %81 : vector<1x256xf32>
    %86 = arith.addf %80, %85 : vector<1x256xf32>
    %c77 = arith.constant 77 : index
    %87 = memref.load %arg1[%c77] : memref<98xf32, #tpu.memory_space<smem>>
    %88 = vector.broadcast %87 : f32 to vector<1x256xf32>
    %89 = arith.mulf %88, %82 : vector<1x256xf32>
    %90 = arith.addf %86, %89 : vector<1x256xf32>
    %c0_43 = arith.constant 0 : index
    %c80 = arith.constant 80 : index
    %91 = vector.load %arg9[%c0_43, %c80] : memref<2x358xf32, #tpu.memory_space<vmem>>, vector<1x256xf32>
    %c1_44 = arith.constant 1 : index
    %c80_45 = arith.constant 80 : index
    %92 = vector.load %arg9[%c1_44, %c80_45] : memref<2x358xf32, #tpu.memory_space<vmem>>, vector<1x256xf32>
    %c35 = arith.constant 35 : index
    %93 = memref.load %arg1[%c35] : memref<98xf32, #tpu.memory_space<smem>>
    %94 = vector.broadcast %93 : f32 to vector<1x256xf32>
    %95 = arith.mulf %94, %91 : vector<1x256xf32>
    %96 = arith.addf %90, %95 : vector<1x256xf32>
    %c84 = arith.constant 84 : index
    %97 = memref.load %arg1[%c84] : memref<98xf32, #tpu.memory_space<smem>>
    %98 = vector.broadcast %97 : f32 to vector<1x256xf32>
    %99 = arith.mulf %98, %92 : vector<1x256xf32>
    %100 = arith.addf %96, %99 : vector<1x256xf32>
    %c0_46 = arith.constant 0 : index
    %c96 = arith.constant 96 : index
    %101 = vector.load %arg9[%c0_46, %c96] : memref<2x358xf32, #tpu.memory_space<vmem>>, vector<1x256xf32>
    %c1_47 = arith.constant 1 : index
    %c96_48 = arith.constant 96 : index
    %102 = vector.load %arg9[%c1_47, %c96_48] : memref<2x358xf32, #tpu.memory_space<vmem>>, vector<1x256xf32>
    %c42 = arith.constant 42 : index
    %103 = memref.load %arg1[%c42] : memref<98xf32, #tpu.memory_space<smem>>
    %104 = vector.broadcast %103 : f32 to vector<1x256xf32>
    %105 = arith.mulf %104, %101 : vector<1x256xf32>
    %106 = arith.addf %100, %105 : vector<1x256xf32>
    %c91 = arith.constant 91 : index
    %107 = memref.load %arg1[%c91] : memref<98xf32, #tpu.memory_space<smem>>
    %108 = vector.broadcast %107 : f32 to vector<1x256xf32>
    %109 = arith.mulf %108, %102 : vector<1x256xf32>
    %110 = arith.addf %106, %109 : vector<1x256xf32>
    %c-3_i32 = arith.constant -3 : i32
    %111 = vector.broadcast %c-3_i32 : i32 to vector<1x256xi32>
    %112 = arith.addi %38, %111 : vector<1x256xi32>
    %c0_i32_49 = arith.constant 0 : i32
    %113 = vector.broadcast %c0_i32_49 : i32 to vector<1x256xi32>
    %114 = arith.cmpi sge, %112, %113 : vector<1x256xi32>
    %c-3_i32_50 = arith.constant -3 : i32
    %115 = vector.broadcast %c-3_i32_50 : i32 to vector<1x256xi32>
    %116 = arith.addi %38, %115 : vector<1x256xi32>
    %c16_i32_51 = arith.constant 16 : i32
    %117 = vector.broadcast %c16_i32_51 : i32 to vector<1x256xi32>
    %118 = arith.cmpi slt, %116, %117 : vector<1x256xi32>
    %119 = arith.andi %114, %118 : vector<1x256xi1>
    %120 = arith.extui %119 : vector<1x256xi1> to vector<1x256xi32>
    %121 = arith.sitofp %120 : vector<1x256xi32> to vector<1x256xf32>
    %122 = arith.mulf %110, %121 : vector<1x256xf32>
    %123 = arith.addf %39, %122 : vector<1x256xf32>
    %cst_52 = arith.constant 0.000000e+00 : f32
    %124 = vector.broadcast %cst_52 : f32 to vector<1x256xf32>
    %c0_53 = arith.constant 0 : index
    %c1_54 = arith.constant 1 : index
    %125 = vector.load %arg9[%c0_53, %c1_54] : memref<2x358xf32, #tpu.memory_space<vmem>>, vector<1x256xf32>
    %c1_55 = arith.constant 1 : index
    %c1_56 = arith.constant 1 : index
    %126 = vector.load %arg9[%c1_55, %c1_56] : memref<2x358xf32, #tpu.memory_space<vmem>>, vector<1x256xf32>
    %c1_57 = arith.constant 1 : index
    %127 = memref.load %arg1[%c1_57] : memref<98xf32, #tpu.memory_space<smem>>
    %128 = vector.broadcast %127 : f32 to vector<1x256xf32>
    %129 = arith.mulf %128, %125 : vector<1x256xf32>
    %130 = arith.addf %124, %129 : vector<1x256xf32>
    %c50 = arith.constant 50 : index
    %131 = memref.load %arg1[%c50] : memref<98xf32, #tpu.memory_space<smem>>
    %132 = vector.broadcast %131 : f32 to vector<1x256xf32>
    %133 = arith.mulf %132, %126 : vector<1x256xf32>
    %134 = arith.addf %130, %133 : vector<1x256xf32>
    %c0_58 = arith.constant 0 : index
    %c17 = arith.constant 17 : index
    %135 = vector.load %arg9[%c0_58, %c17] : memref<2x358xf32, #tpu.memory_space<vmem>>, vector<1x256xf32>
    %c1_59 = arith.constant 1 : index
    %c17_60 = arith.constant 17 : index
    %136 = vector.load %arg9[%c1_59, %c17_60] : memref<2x358xf32, #tpu.memory_space<vmem>>, vector<1x256xf32>
    %c8 = arith.constant 8 : index
    %137 = memref.load %arg1[%c8] : memref<98xf32, #tpu.memory_space<smem>>
    %138 = vector.broadcast %137 : f32 to vector<1x256xf32>
    %139 = arith.mulf %138, %135 : vector<1x256xf32>
    %140 = arith.addf %134, %139 : vector<1x256xf32>
    %c57 = arith.constant 57 : index
    %141 = memref.load %arg1[%c57] : memref<98xf32, #tpu.memory_space<smem>>
    %142 = vector.broadcast %141 : f32 to vector<1x256xf32>
    %143 = arith.mulf %142, %136 : vector<1x256xf32>
    %144 = arith.addf %140, %143 : vector<1x256xf32>
    %c0_61 = arith.constant 0 : index
    %c33 = arith.constant 33 : index
    %145 = vector.load %arg9[%c0_61, %c33] : memref<2x358xf32, #tpu.memory_space<vmem>>, vector<1x256xf32>
    %c1_62 = arith.constant 1 : index
    %c33_63 = arith.constant 33 : index
    %146 = vector.load %arg9[%c1_62, %c33_63] : memref<2x358xf32, #tpu.memory_space<vmem>>, vector<1x256xf32>
    %c15 = arith.constant 15 : index
    %147 = memref.load %arg1[%c15] : memref<98xf32, #tpu.memory_space<smem>>
    %148 = vector.broadcast %147 : f32 to vector<1x256xf32>
    %149 = arith.mulf %148, %145 : vector<1x256xf32>
    %150 = arith.addf %144, %149 : vector<1x256xf32>
    %c64_64 = arith.constant 64 : index
    %151 = memref.load %arg1[%c64_64] : memref<98xf32, #tpu.memory_space<smem>>
    %152 = vector.broadcast %151 : f32 to vector<1x256xf32>
    %153 = arith.mulf %152, %146 : vector<1x256xf32>
    %154 = arith.addf %150, %153 : vector<1x256xf32>
    %c0_65 = arith.constant 0 : index
    %c49_66 = arith.constant 49 : index
    %155 = vector.load %arg9[%c0_65, %c49_66] : memref<2x358xf32, #tpu.memory_space<vmem>>, vector<1x256xf32>
    %c1_67 = arith.constant 1 : index
    %c49_68 = arith.constant 49 : index
    %156 = vector.load %arg9[%c1_67, %c49_68] : memref<2x358xf32, #tpu.memory_space<vmem>>, vector<1x256xf32>
    %c22 = arith.constant 22 : index
    %157 = memref.load %arg1[%c22] : memref<98xf32, #tpu.memory_space<smem>>
    %158 = vector.broadcast %157 : f32 to vector<1x256xf32>
    %159 = arith.mulf %158, %155 : vector<1x256xf32>
    %160 = arith.addf %154, %159 : vector<1x256xf32>
    %c71 = arith.constant 71 : index
    %161 = memref.load %arg1[%c71] : memref<98xf32, #tpu.memory_space<smem>>
    %162 = vector.broadcast %161 : f32 to vector<1x256xf32>
    %163 = arith.mulf %162, %156 : vector<1x256xf32>
    %164 = arith.addf %160, %163 : vector<1x256xf32>
    %c0_69 = arith.constant 0 : index
    %c65 = arith.constant 65 : index
    %165 = vector.load %arg9[%c0_69, %c65] : memref<2x358xf32, #tpu.memory_space<vmem>>, vector<1x256xf32>
    %c1_70 = arith.constant 1 : index
    %c65_71 = arith.constant 65 : index
    %166 = vector.load %arg9[%c1_70, %c65_71] : memref<2x358xf32, #tpu.memory_space<vmem>>, vector<1x256xf32>
    %c29 = arith.constant 29 : index
    %167 = memref.load %arg1[%c29] : memref<98xf32, #tpu.memory_space<smem>>
    %168 = vector.broadcast %167 : f32 to vector<1x256xf32>
    %169 = arith.mulf %168, %165 : vector<1x256xf32>
    %170 = arith.addf %164, %169 : vector<1x256xf32>
    %c78 = arith.constant 78 : index
    %171 = memref.load %arg1[%c78] : memref<98xf32, #tpu.memory_space<smem>>
    %172 = vector.broadcast %171 : f32 to vector<1x256xf32>
    %173 = arith.mulf %172, %166 : vector<1x256xf32>
    %174 = arith.addf %170, %173 : vector<1x256xf32>
    %c0_72 = arith.constant 0 : index
    %c81 = arith.constant 81 : index
    %175 = vector.load %arg9[%c0_72, %c81] : memref<2x358xf32, #tpu.memory_space<vmem>>, vector<1x256xf32>
    %c1_73 = arith.constant 1 : index
    %c81_74 = arith.constant 81 : index
    %176 = vector.load %arg9[%c1_73, %c81_74] : memref<2x358xf32, #tpu.memory_space<vmem>>, vector<1x256xf32>
    %c36 = arith.constant 36 : index
    %177 = memref.load %arg1[%c36] : memref<98xf32, #tpu.memory_space<smem>>
    %178 = vector.broadcast %177 : f32 to vector<1x256xf32>
    %179 = arith.mulf %178, %175 : vector<1x256xf32>
    %180 = arith.addf %174, %179 : vector<1x256xf32>
    %c85 = arith.constant 85 : index
    %181 = memref.load %arg1[%c85] : memref<98xf32, #tpu.memory_space<smem>>
    %182 = vector.broadcast %181 : f32 to vector<1x256xf32>
    %183 = arith.mulf %182, %176 : vector<1x256xf32>
    %184 = arith.addf %180, %183 : vector<1x256xf32>
    %c0_75 = arith.constant 0 : index
    %c97 = arith.constant 97 : index
    %185 = vector.load %arg9[%c0_75, %c97] : memref<2x358xf32, #tpu.memory_space<vmem>>, vector<1x256xf32>
    %c1_76 = arith.constant 1 : index
    %c97_77 = arith.constant 97 : index
    %186 = vector.load %arg9[%c1_76, %c97_77] : memref<2x358xf32, #tpu.memory_space<vmem>>, vector<1x256xf32>
    %c43 = arith.constant 43 : index
    %187 = memref.load %arg1[%c43] : memref<98xf32, #tpu.memory_space<smem>>
    %188 = vector.broadcast %187 : f32 to vector<1x256xf32>
    %189 = arith.mulf %188, %185 : vector<1x256xf32>
    %190 = arith.addf %184, %189 : vector<1x256xf32>
    %c92 = arith.constant 92 : index
    %191 = memref.load %arg1[%c92] : memref<98xf32, #tpu.memory_space<smem>>
    %192 = vector.broadcast %191 : f32 to vector<1x256xf32>
    %193 = arith.mulf %192, %186 : vector<1x256xf32>
    %194 = arith.addf %190, %193 : vector<1x256xf32>
    %c-2_i32 = arith.constant -2 : i32
    %195 = vector.broadcast %c-2_i32 : i32 to vector<1x256xi32>
    %196 = arith.addi %38, %195 : vector<1x256xi32>
    %c0_i32_78 = arith.constant 0 : i32
    %197 = vector.broadcast %c0_i32_78 : i32 to vector<1x256xi32>
    %198 = arith.cmpi sge, %196, %197 : vector<1x256xi32>
    %c-2_i32_79 = arith.constant -2 : i32
    %199 = vector.broadcast %c-2_i32_79 : i32 to vector<1x256xi32>
    %200 = arith.addi %38, %199 : vector<1x256xi32>
    %c16_i32_80 = arith.constant 16 : i32
    %201 = vector.broadcast %c16_i32_80 : i32 to vector<1x256xi32>
    %202 = arith.cmpi slt, %200, %201 : vector<1x256xi32>
    %203 = arith.andi %198, %202 : vector<1x256xi1>
    %204 = arith.extui %203 : vector<1x256xi1> to vector<1x256xi32>
    %205 = arith.sitofp %204 : vector<1x256xi32> to vector<1x256xf32>
    %206 = arith.mulf %194, %205 : vector<1x256xf32>
    %207 = arith.addf %123, %206 : vector<1x256xf32>
    %cst_81 = arith.constant 0.000000e+00 : f32
    %208 = vector.broadcast %cst_81 : f32 to vector<1x256xf32>
    %c0_82 = arith.constant 0 : index
    %c2 = arith.constant 2 : index
    %209 = vector.load %arg9[%c0_82, %c2] : memref<2x358xf32, #tpu.memory_space<vmem>>, vector<1x256xf32>
    %c1_83 = arith.constant 1 : index
    %c2_84 = arith.constant 2 : index
    %210 = vector.load %arg9[%c1_83, %c2_84] : memref<2x358xf32, #tpu.memory_space<vmem>>, vector<1x256xf32>
    %c2_85 = arith.constant 2 : index
    %211 = memref.load %arg1[%c2_85] : memref<98xf32, #tpu.memory_space<smem>>
    %212 = vector.broadcast %211 : f32 to vector<1x256xf32>
    %213 = arith.mulf %212, %209 : vector<1x256xf32>
    %214 = arith.addf %208, %213 : vector<1x256xf32>
    %c51_86 = arith.constant 51 : index
    %215 = memref.load %arg1[%c51_86] : memref<98xf32, #tpu.memory_space<smem>>
    %216 = vector.broadcast %215 : f32 to vector<1x256xf32>
    %217 = arith.mulf %216, %210 : vector<1x256xf32>
    %218 = arith.addf %214, %217 : vector<1x256xf32>
    %c0_87 = arith.constant 0 : index
    %c18 = arith.constant 18 : index
    %219 = vector.load %arg9[%c0_87, %c18] : memref<2x358xf32, #tpu.memory_space<vmem>>, vector<1x256xf32>
    %c1_88 = arith.constant 1 : index
    %c18_89 = arith.constant 18 : index
    %220 = vector.load %arg9[%c1_88, %c18_89] : memref<2x358xf32, #tpu.memory_space<vmem>>, vector<1x256xf32>
    %c9 = arith.constant 9 : index
    %221 = memref.load %arg1[%c9] : memref<98xf32, #tpu.memory_space<smem>>
    %222 = vector.broadcast %221 : f32 to vector<1x256xf32>
    %223 = arith.mulf %222, %219 : vector<1x256xf32>
    %224 = arith.addf %218, %223 : vector<1x256xf32>
    %c58 = arith.constant 58 : index
    %225 = memref.load %arg1[%c58] : memref<98xf32, #tpu.memory_space<smem>>
    %226 = vector.broadcast %225 : f32 to vector<1x256xf32>
    %227 = arith.mulf %226, %220 : vector<1x256xf32>
    %228 = arith.addf %224, %227 : vector<1x256xf32>
    %c0_90 = arith.constant 0 : index
    %c34 = arith.constant 34 : index
    %229 = vector.load %arg9[%c0_90, %c34] : memref<2x358xf32, #tpu.memory_space<vmem>>, vector<1x256xf32>
    %c1_91 = arith.constant 1 : index
    %c34_92 = arith.constant 34 : index
    %230 = vector.load %arg9[%c1_91, %c34_92] : memref<2x358xf32, #tpu.memory_space<vmem>>, vector<1x256xf32>
    %c16_93 = arith.constant 16 : index
    %231 = memref.load %arg1[%c16_93] : memref<98xf32, #tpu.memory_space<smem>>
    %232 = vector.broadcast %231 : f32 to vector<1x256xf32>
    %233 = arith.mulf %232, %229 : vector<1x256xf32>
    %234 = arith.addf %228, %233 : vector<1x256xf32>
    %c65_94 = arith.constant 65 : index
    %235 = memref.load %arg1[%c65_94] : memref<98xf32, #tpu.memory_space<smem>>
    %236 = vector.broadcast %235 : f32 to vector<1x256xf32>
    %237 = arith.mulf %236, %230 : vector<1x256xf32>
    %238 = arith.addf %234, %237 : vector<1x256xf32>
    %c0_95 = arith.constant 0 : index
    %c50_96 = arith.constant 50 : index
    %239 = vector.load %arg9[%c0_95, %c50_96] : memref<2x358xf32, #tpu.memory_space<vmem>>, vector<1x256xf32>
    %c1_97 = arith.constant 1 : index
    %c50_98 = arith.constant 50 : index
    %240 = vector.load %arg9[%c1_97, %c50_98] : memref<2x358xf32, #tpu.memory_space<vmem>>, vector<1x256xf32>
    %c23 = arith.constant 23 : index
    %241 = memref.load %arg1[%c23] : memref<98xf32, #tpu.memory_space<smem>>
    %242 = vector.broadcast %241 : f32 to vector<1x256xf32>
    %243 = arith.mulf %242, %239 : vector<1x256xf32>
    %244 = arith.addf %238, %243 : vector<1x256xf32>
    %c72 = arith.constant 72 : index
    %245 = memref.load %arg1[%c72] : memref<98xf32, #tpu.memory_space<smem>>
    %246 = vector.broadcast %245 : f32 to vector<1x256xf32>
    %247 = arith.mulf %246, %240 : vector<1x256xf32>
    %248 = arith.addf %244, %247 : vector<1x256xf32>
    %c0_99 = arith.constant 0 : index
    %c66 = arith.constant 66 : index
    %249 = vector.load %arg9[%c0_99, %c66] : memref<2x358xf32, #tpu.memory_space<vmem>>, vector<1x256xf32>
    %c1_100 = arith.constant 1 : index
    %c66_101 = arith.constant 66 : index
    %250 = vector.load %arg9[%c1_100, %c66_101] : memref<2x358xf32, #tpu.memory_space<vmem>>, vector<1x256xf32>
    %c30 = arith.constant 30 : index
    %251 = memref.load %arg1[%c30] : memref<98xf32, #tpu.memory_space<smem>>
    %252 = vector.broadcast %251 : f32 to vector<1x256xf32>
    %253 = arith.mulf %252, %249 : vector<1x256xf32>
    %254 = arith.addf %248, %253 : vector<1x256xf32>
    %c79 = arith.constant 79 : index
    %255 = memref.load %arg1[%c79] : memref<98xf32, #tpu.memory_space<smem>>
    %256 = vector.broadcast %255 : f32 to vector<1x256xf32>
    %257 = arith.mulf %256, %250 : vector<1x256xf32>
    %258 = arith.addf %254, %257 : vector<1x256xf32>
    %c0_102 = arith.constant 0 : index
    %c82 = arith.constant 82 : index
    %259 = vector.load %arg9[%c0_102, %c82] : memref<2x358xf32, #tpu.memory_space<vmem>>, vector<1x256xf32>
    %c1_103 = arith.constant 1 : index
    %c82_104 = arith.constant 82 : index
    %260 = vector.load %arg9[%c1_103, %c82_104] : memref<2x358xf32, #tpu.memory_space<vmem>>, vector<1x256xf32>
    %c37 = arith.constant 37 : index
    %261 = memref.load %arg1[%c37] : memref<98xf32, #tpu.memory_space<smem>>
    %262 = vector.broadcast %261 : f32 to vector<1x256xf32>
    %263 = arith.mulf %262, %259 : vector<1x256xf32>
    %264 = arith.addf %258, %263 : vector<1x256xf32>
    %c86 = arith.constant 86 : index
    %265 = memref.load %arg1[%c86] : memref<98xf32, #tpu.memory_space<smem>>
    %266 = vector.broadcast %265 : f32 to vector<1x256xf32>
    %267 = arith.mulf %266, %260 : vector<1x256xf32>
    %268 = arith.addf %264, %267 : vector<1x256xf32>
    %c0_105 = arith.constant 0 : index
    %c98 = arith.constant 98 : index
    %269 = vector.load %arg9[%c0_105, %c98] : memref<2x358xf32, #tpu.memory_space<vmem>>, vector<1x256xf32>
    %c1_106 = arith.constant 1 : index
    %c98_107 = arith.constant 98 : index
    %270 = vector.load %arg9[%c1_106, %c98_107] : memref<2x358xf32, #tpu.memory_space<vmem>>, vector<1x256xf32>
    %c44 = arith.constant 44 : index
    %271 = memref.load %arg1[%c44] : memref<98xf32, #tpu.memory_space<smem>>
    %272 = vector.broadcast %271 : f32 to vector<1x256xf32>
    %273 = arith.mulf %272, %269 : vector<1x256xf32>
    %274 = arith.addf %268, %273 : vector<1x256xf32>
    %c93 = arith.constant 93 : index
    %275 = memref.load %arg1[%c93] : memref<98xf32, #tpu.memory_space<smem>>
    %276 = vector.broadcast %275 : f32 to vector<1x256xf32>
    %277 = arith.mulf %276, %270 : vector<1x256xf32>
    %278 = arith.addf %274, %277 : vector<1x256xf32>
    %c-1_i32 = arith.constant -1 : i32
    %279 = vector.broadcast %c-1_i32 : i32 to vector<1x256xi32>
    %280 = arith.addi %38, %279 : vector<1x256xi32>
    %c0_i32_108 = arith.constant 0 : i32
    %281 = vector.broadcast %c0_i32_108 : i32 to vector<1x256xi32>
    %282 = arith.cmpi sge, %280, %281 : vector<1x256xi32>
    %c-1_i32_109 = arith.constant -1 : i32
    %283 = vector.broadcast %c-1_i32_109 : i32 to vector<1x256xi32>
    %284 = arith.addi %38, %283 : vector<1x256xi32>
    %c16_i32_110 = arith.constant 16 : i32
    %285 = vector.broadcast %c16_i32_110 : i32 to vector<1x256xi32>
    %286 = arith.cmpi slt, %284, %285 : vector<1x256xi32>
    %287 = arith.andi %282, %286 : vector<1x256xi1>
    %288 = arith.extui %287 : vector<1x256xi1> to vector<1x256xi32>
    %289 = arith.sitofp %288 : vector<1x256xi32> to vector<1x256xf32>
    %290 = arith.mulf %278, %289 : vector<1x256xf32>
    %291 = arith.addf %207, %290 : vector<1x256xf32>
    %cst_111 = arith.constant 0.000000e+00 : f32
    %292 = vector.broadcast %cst_111 : f32 to vector<1x256xf32>
    %c0_112 = arith.constant 0 : index
    %c3 = arith.constant 3 : index
    %293 = vector.load %arg9[%c0_112, %c3] : memref<2x358xf32, #tpu.memory_space<vmem>>, vector<1x256xf32>
    %c1_113 = arith.constant 1 : index
    %c3_114 = arith.constant 3 : index
    %294 = vector.load %arg9[%c1_113, %c3_114] : memref<2x358xf32, #tpu.memory_space<vmem>>, vector<1x256xf32>
    %c3_115 = arith.constant 3 : index
    %295 = memref.load %arg1[%c3_115] : memref<98xf32, #tpu.memory_space<smem>>
    %296 = vector.broadcast %295 : f32 to vector<1x256xf32>
    %297 = arith.mulf %296, %293 : vector<1x256xf32>
    %298 = arith.addf %292, %297 : vector<1x256xf32>
    %c52 = arith.constant 52 : index
    %299 = memref.load %arg1[%c52] : memref<98xf32, #tpu.memory_space<smem>>
    %300 = vector.broadcast %299 : f32 to vector<1x256xf32>
    %301 = arith.mulf %300, %294 : vector<1x256xf32>
    %302 = arith.addf %298, %301 : vector<1x256xf32>
    %c0_116 = arith.constant 0 : index
    %c19 = arith.constant 19 : index
    %303 = vector.load %arg9[%c0_116, %c19] : memref<2x358xf32, #tpu.memory_space<vmem>>, vector<1x256xf32>
    %c1_117 = arith.constant 1 : index
    %c19_118 = arith.constant 19 : index
    %304 = vector.load %arg9[%c1_117, %c19_118] : memref<2x358xf32, #tpu.memory_space<vmem>>, vector<1x256xf32>
    %c10 = arith.constant 10 : index
    %305 = memref.load %arg1[%c10] : memref<98xf32, #tpu.memory_space<smem>>
    %306 = vector.broadcast %305 : f32 to vector<1x256xf32>
    %307 = arith.mulf %306, %303 : vector<1x256xf32>
    %308 = arith.addf %302, %307 : vector<1x256xf32>
    %c59 = arith.constant 59 : index
    %309 = memref.load %arg1[%c59] : memref<98xf32, #tpu.memory_space<smem>>
    %310 = vector.broadcast %309 : f32 to vector<1x256xf32>
    %311 = arith.mulf %310, %304 : vector<1x256xf32>
    %312 = arith.addf %308, %311 : vector<1x256xf32>
    %c0_119 = arith.constant 0 : index
    %c35_120 = arith.constant 35 : index
    %313 = vector.load %arg9[%c0_119, %c35_120] : memref<2x358xf32, #tpu.memory_space<vmem>>, vector<1x256xf32>
    %c1_121 = arith.constant 1 : index
    %c35_122 = arith.constant 35 : index
    %314 = vector.load %arg9[%c1_121, %c35_122] : memref<2x358xf32, #tpu.memory_space<vmem>>, vector<1x256xf32>
    %c17_123 = arith.constant 17 : index
    %315 = memref.load %arg1[%c17_123] : memref<98xf32, #tpu.memory_space<smem>>
    %316 = vector.broadcast %315 : f32 to vector<1x256xf32>
    %317 = arith.mulf %316, %313 : vector<1x256xf32>
    %318 = arith.addf %312, %317 : vector<1x256xf32>
    %c66_124 = arith.constant 66 : index
    %319 = memref.load %arg1[%c66_124] : memref<98xf32, #tpu.memory_space<smem>>
    %320 = vector.broadcast %319 : f32 to vector<1x256xf32>
    %321 = arith.mulf %320, %314 : vector<1x256xf32>
    %322 = arith.addf %318, %321 : vector<1x256xf32>
    %c0_125 = arith.constant 0 : index
    %c51_126 = arith.constant 51 : index
    %323 = vector.load %arg9[%c0_125, %c51_126] : memref<2x358xf32, #tpu.memory_space<vmem>>, vector<1x256xf32>
    %c1_127 = arith.constant 1 : index
    %c51_128 = arith.constant 51 : index
    %324 = vector.load %arg9[%c1_127, %c51_128] : memref<2x358xf32, #tpu.memory_space<vmem>>, vector<1x256xf32>
    %c24 = arith.constant 24 : index
    %325 = memref.load %arg1[%c24] : memref<98xf32, #tpu.memory_space<smem>>
    %326 = vector.broadcast %325 : f32 to vector<1x256xf32>
    %327 = arith.mulf %326, %323 : vector<1x256xf32>
    %328 = arith.addf %322, %327 : vector<1x256xf32>
    %c73 = arith.constant 73 : index
    %329 = memref.load %arg1[%c73] : memref<98xf32, #tpu.memory_space<smem>>
    %330 = vector.broadcast %329 : f32 to vector<1x256xf32>
    %331 = arith.mulf %330, %324 : vector<1x256xf32>
    %332 = arith.addf %328, %331 : vector<1x256xf32>
    %c0_129 = arith.constant 0 : index
    %c67 = arith.constant 67 : index
    %333 = vector.load %arg9[%c0_129, %c67] : memref<2x358xf32, #tpu.memory_space<vmem>>, vector<1x256xf32>
    %c1_130 = arith.constant 1 : index
    %c67_131 = arith.constant 67 : index
    %334 = vector.load %arg9[%c1_130, %c67_131] : memref<2x358xf32, #tpu.memory_space<vmem>>, vector<1x256xf32>
    %c31 = arith.constant 31 : index
    %335 = memref.load %arg1[%c31] : memref<98xf32, #tpu.memory_space<smem>>
    %336 = vector.broadcast %335 : f32 to vector<1x256xf32>
    %337 = arith.mulf %336, %333 : vector<1x256xf32>
    %338 = arith.addf %332, %337 : vector<1x256xf32>
    %c80_132 = arith.constant 80 : index
    %339 = memref.load %arg1[%c80_132] : memref<98xf32, #tpu.memory_space<smem>>
    %340 = vector.broadcast %339 : f32 to vector<1x256xf32>
    %341 = arith.mulf %340, %334 : vector<1x256xf32>
    %342 = arith.addf %338, %341 : vector<1x256xf32>
    %c0_133 = arith.constant 0 : index
    %c83 = arith.constant 83 : index
    %343 = vector.load %arg9[%c0_133, %c83] : memref<2x358xf32, #tpu.memory_space<vmem>>, vector<1x256xf32>
    %c1_134 = arith.constant 1 : index
    %c83_135 = arith.constant 83 : index
    %344 = vector.load %arg9[%c1_134, %c83_135] : memref<2x358xf32, #tpu.memory_space<vmem>>, vector<1x256xf32>
    %c38 = arith.constant 38 : index
    %345 = memref.load %arg1[%c38] : memref<98xf32, #tpu.memory_space<smem>>
    %346 = vector.broadcast %345 : f32 to vector<1x256xf32>
    %347 = arith.mulf %346, %343 : vector<1x256xf32>
    %348 = arith.addf %342, %347 : vector<1x256xf32>
    %c87 = arith.constant 87 : index
    %349 = memref.load %arg1[%c87] : memref<98xf32, #tpu.memory_space<smem>>
    %350 = vector.broadcast %349 : f32 to vector<1x256xf32>
    %351 = arith.mulf %350, %344 : vector<1x256xf32>
    %352 = arith.addf %348, %351 : vector<1x256xf32>
    %c0_136 = arith.constant 0 : index
    %c99 = arith.constant 99 : index
    %353 = vector.load %arg9[%c0_136, %c99] : memref<2x358xf32, #tpu.memory_space<vmem>>, vector<1x256xf32>
    %c1_137 = arith.constant 1 : index
    %c99_138 = arith.constant 99 : index
    %354 = vector.load %arg9[%c1_137, %c99_138] : memref<2x358xf32, #tpu.memory_space<vmem>>, vector<1x256xf32>
    %c45 = arith.constant 45 : index
    %355 = memref.load %arg1[%c45] : memref<98xf32, #tpu.memory_space<smem>>
    %356 = vector.broadcast %355 : f32 to vector<1x256xf32>
    %357 = arith.mulf %356, %353 : vector<1x256xf32>
    %358 = arith.addf %352, %357 : vector<1x256xf32>
    %c94 = arith.constant 94 : index
    %359 = memref.load %arg1[%c94] : memref<98xf32, #tpu.memory_space<smem>>
    %360 = vector.broadcast %359 : f32 to vector<1x256xf32>
    %361 = arith.mulf %360, %354 : vector<1x256xf32>
    %362 = arith.addf %358, %361 : vector<1x256xf32>
    %363 = arith.addf %291, %362 : vector<1x256xf32>
    %cst_139 = arith.constant 0.000000e+00 : f32
    %364 = vector.broadcast %cst_139 : f32 to vector<1x256xf32>
    %c0_140 = arith.constant 0 : index
    %c4 = arith.constant 4 : index
    %365 = vector.load %arg9[%c0_140, %c4] : memref<2x358xf32, #tpu.memory_space<vmem>>, vector<1x256xf32>
    %c1_141 = arith.constant 1 : index
    %c4_142 = arith.constant 4 : index
    %366 = vector.load %arg9[%c1_141, %c4_142] : memref<2x358xf32, #tpu.memory_space<vmem>>, vector<1x256xf32>
    %c4_143 = arith.constant 4 : index
    %367 = memref.load %arg1[%c4_143] : memref<98xf32, #tpu.memory_space<smem>>
    %368 = vector.broadcast %367 : f32 to vector<1x256xf32>
    %369 = arith.mulf %368, %365 : vector<1x256xf32>
    %370 = arith.addf %364, %369 : vector<1x256xf32>
    %c53 = arith.constant 53 : index
    %371 = memref.load %arg1[%c53] : memref<98xf32, #tpu.memory_space<smem>>
    %372 = vector.broadcast %371 : f32 to vector<1x256xf32>
    %373 = arith.mulf %372, %366 : vector<1x256xf32>
    %374 = arith.addf %370, %373 : vector<1x256xf32>
    %c0_144 = arith.constant 0 : index
    %c20 = arith.constant 20 : index
    %375 = vector.load %arg9[%c0_144, %c20] : memref<2x358xf32, #tpu.memory_space<vmem>>, vector<1x256xf32>
    %c1_145 = arith.constant 1 : index
    %c20_146 = arith.constant 20 : index
    %376 = vector.load %arg9[%c1_145, %c20_146] : memref<2x358xf32, #tpu.memory_space<vmem>>, vector<1x256xf32>
    %c11 = arith.constant 11 : index
    %377 = memref.load %arg1[%c11] : memref<98xf32, #tpu.memory_space<smem>>
    %378 = vector.broadcast %377 : f32 to vector<1x256xf32>
    %379 = arith.mulf %378, %375 : vector<1x256xf32>
    %380 = arith.addf %374, %379 : vector<1x256xf32>
    %c60 = arith.constant 60 : index
    %381 = memref.load %arg1[%c60] : memref<98xf32, #tpu.memory_space<smem>>
    %382 = vector.broadcast %381 : f32 to vector<1x256xf32>
    %383 = arith.mulf %382, %376 : vector<1x256xf32>
    %384 = arith.addf %380, %383 : vector<1x256xf32>
    %c0_147 = arith.constant 0 : index
    %c36_148 = arith.constant 36 : index
    %385 = vector.load %arg9[%c0_147, %c36_148] : memref<2x358xf32, #tpu.memory_space<vmem>>, vector<1x256xf32>
    %c1_149 = arith.constant 1 : index
    %c36_150 = arith.constant 36 : index
    %386 = vector.load %arg9[%c1_149, %c36_150] : memref<2x358xf32, #tpu.memory_space<vmem>>, vector<1x256xf32>
    %c18_151 = arith.constant 18 : index
    %387 = memref.load %arg1[%c18_151] : memref<98xf32, #tpu.memory_space<smem>>
    %388 = vector.broadcast %387 : f32 to vector<1x256xf32>
    %389 = arith.mulf %388, %385 : vector<1x256xf32>
    %390 = arith.addf %384, %389 : vector<1x256xf32>
    %c67_152 = arith.constant 67 : index
    %391 = memref.load %arg1[%c67_152] : memref<98xf32, #tpu.memory_space<smem>>
    %392 = vector.broadcast %391 : f32 to vector<1x256xf32>
    %393 = arith.mulf %392, %386 : vector<1x256xf32>
    %394 = arith.addf %390, %393 : vector<1x256xf32>
    %c0_153 = arith.constant 0 : index
    %c52_154 = arith.constant 52 : index
    %395 = vector.load %arg9[%c0_153, %c52_154] : memref<2x358xf32, #tpu.memory_space<vmem>>, vector<1x256xf32>
    %c1_155 = arith.constant 1 : index
    %c52_156 = arith.constant 52 : index
    %396 = vector.load %arg9[%c1_155, %c52_156] : memref<2x358xf32, #tpu.memory_space<vmem>>, vector<1x256xf32>
    %c25 = arith.constant 25 : index
    %397 = memref.load %arg1[%c25] : memref<98xf32, #tpu.memory_space<smem>>
    %398 = vector.broadcast %397 : f32 to vector<1x256xf32>
    %399 = arith.mulf %398, %395 : vector<1x256xf32>
    %400 = arith.addf %394, %399 : vector<1x256xf32>
    %c74 = arith.constant 74 : index
    %401 = memref.load %arg1[%c74] : memref<98xf32, #tpu.memory_space<smem>>
    %402 = vector.broadcast %401 : f32 to vector<1x256xf32>
    %403 = arith.mulf %402, %396 : vector<1x256xf32>
    %404 = arith.addf %400, %403 : vector<1x256xf32>
    %c0_157 = arith.constant 0 : index
    %c68 = arith.constant 68 : index
    %405 = vector.load %arg9[%c0_157, %c68] : memref<2x358xf32, #tpu.memory_space<vmem>>, vector<1x256xf32>
    %c1_158 = arith.constant 1 : index
    %c68_159 = arith.constant 68 : index
    %406 = vector.load %arg9[%c1_158, %c68_159] : memref<2x358xf32, #tpu.memory_space<vmem>>, vector<1x256xf32>
    %c32_160 = arith.constant 32 : index
    %407 = memref.load %arg1[%c32_160] : memref<98xf32, #tpu.memory_space<smem>>
    %408 = vector.broadcast %407 : f32 to vector<1x256xf32>
    %409 = arith.mulf %408, %405 : vector<1x256xf32>
    %410 = arith.addf %404, %409 : vector<1x256xf32>
    %c81_161 = arith.constant 81 : index
    %411 = memref.load %arg1[%c81_161] : memref<98xf32, #tpu.memory_space<smem>>
    %412 = vector.broadcast %411 : f32 to vector<1x256xf32>
    %413 = arith.mulf %412, %406 : vector<1x256xf32>
    %414 = arith.addf %410, %413 : vector<1x256xf32>
    %c0_162 = arith.constant 0 : index
    %c84_163 = arith.constant 84 : index
    %415 = vector.load %arg9[%c0_162, %c84_163] : memref<2x358xf32, #tpu.memory_space<vmem>>, vector<1x256xf32>
    %c1_164 = arith.constant 1 : index
    %c84_165 = arith.constant 84 : index
    %416 = vector.load %arg9[%c1_164, %c84_165] : memref<2x358xf32, #tpu.memory_space<vmem>>, vector<1x256xf32>
    %c39 = arith.constant 39 : index
    %417 = memref.load %arg1[%c39] : memref<98xf32, #tpu.memory_space<smem>>
    %418 = vector.broadcast %417 : f32 to vector<1x256xf32>
    %419 = arith.mulf %418, %415 : vector<1x256xf32>
    %420 = arith.addf %414, %419 : vector<1x256xf32>
    %c88 = arith.constant 88 : index
    %421 = memref.load %arg1[%c88] : memref<98xf32, #tpu.memory_space<smem>>
    %422 = vector.broadcast %421 : f32 to vector<1x256xf32>
    %423 = arith.mulf %422, %416 : vector<1x256xf32>
    %424 = arith.addf %420, %423 : vector<1x256xf32>
    %c0_166 = arith.constant 0 : index
    %c100 = arith.constant 100 : index
    %425 = vector.load %arg9[%c0_166, %c100] : memref<2x358xf32, #tpu.memory_space<vmem>>, vector<1x256xf32>
    %c1_167 = arith.constant 1 : index
    %c100_168 = arith.constant 100 : index
    %426 = vector.load %arg9[%c1_167, %c100_168] : memref<2x358xf32, #tpu.memory_space<vmem>>, vector<1x256xf32>
    %c46 = arith.constant 46 : index
    %427 = memref.load %arg1[%c46] : memref<98xf32, #tpu.memory_space<smem>>
    %428 = vector.broadcast %427 : f32 to vector<1x256xf32>
    %429 = arith.mulf %428, %425 : vector<1x256xf32>
    %430 = arith.addf %424, %429 : vector<1x256xf32>
    %c95 = arith.constant 95 : index
    %431 = memref.load %arg1[%c95] : memref<98xf32, #tpu.memory_space<smem>>
    %432 = vector.broadcast %431 : f32 to vector<1x256xf32>
    %433 = arith.mulf %432, %426 : vector<1x256xf32>
    %434 = arith.addf %430, %433 : vector<1x256xf32>
    %c1_i32_169 = arith.constant 1 : i32
    %435 = vector.broadcast %c1_i32_169 : i32 to vector<1x256xi32>
    %436 = arith.addi %38, %435 : vector<1x256xi32>
    %c0_i32_170 = arith.constant 0 : i32
    %437 = vector.broadcast %c0_i32_170 : i32 to vector<1x256xi32>
    %438 = arith.cmpi sge, %436, %437 : vector<1x256xi32>
    %c1_i32_171 = arith.constant 1 : i32
    %439 = vector.broadcast %c1_i32_171 : i32 to vector<1x256xi32>
    %440 = arith.addi %38, %439 : vector<1x256xi32>
    %c16_i32_172 = arith.constant 16 : i32
    %441 = vector.broadcast %c16_i32_172 : i32 to vector<1x256xi32>
    %442 = arith.cmpi slt, %440, %441 : vector<1x256xi32>
    %443 = arith.andi %438, %442 : vector<1x256xi1>
    %444 = arith.extui %443 : vector<1x256xi1> to vector<1x256xi32>
    %445 = arith.sitofp %444 : vector<1x256xi32> to vector<1x256xf32>
    %446 = arith.mulf %434, %445 : vector<1x256xf32>
    %447 = arith.addf %363, %446 : vector<1x256xf32>
    %cst_173 = arith.constant 0.000000e+00 : f32
    %448 = vector.broadcast %cst_173 : f32 to vector<1x256xf32>
    %c0_174 = arith.constant 0 : index
    %c5 = arith.constant 5 : index
    %449 = vector.load %arg9[%c0_174, %c5] : memref<2x358xf32, #tpu.memory_space<vmem>>, vector<1x256xf32>
    %c1_175 = arith.constant 1 : index
    %c5_176 = arith.constant 5 : index
    %450 = vector.load %arg9[%c1_175, %c5_176] : memref<2x358xf32, #tpu.memory_space<vmem>>, vector<1x256xf32>
    %c5_177 = arith.constant 5 : index
    %451 = memref.load %arg1[%c5_177] : memref<98xf32, #tpu.memory_space<smem>>
    %452 = vector.broadcast %451 : f32 to vector<1x256xf32>
    %453 = arith.mulf %452, %449 : vector<1x256xf32>
    %454 = arith.addf %448, %453 : vector<1x256xf32>
    %c54 = arith.constant 54 : index
    %455 = memref.load %arg1[%c54] : memref<98xf32, #tpu.memory_space<smem>>
    %456 = vector.broadcast %455 : f32 to vector<1x256xf32>
    %457 = arith.mulf %456, %450 : vector<1x256xf32>
    %458 = arith.addf %454, %457 : vector<1x256xf32>
    %c0_178 = arith.constant 0 : index
    %c21_179 = arith.constant 21 : index
    %459 = vector.load %arg9[%c0_178, %c21_179] : memref<2x358xf32, #tpu.memory_space<vmem>>, vector<1x256xf32>
    %c1_180 = arith.constant 1 : index
    %c21_181 = arith.constant 21 : index
    %460 = vector.load %arg9[%c1_180, %c21_181] : memref<2x358xf32, #tpu.memory_space<vmem>>, vector<1x256xf32>
    %c12 = arith.constant 12 : index
    %461 = memref.load %arg1[%c12] : memref<98xf32, #tpu.memory_space<smem>>
    %462 = vector.broadcast %461 : f32 to vector<1x256xf32>
    %463 = arith.mulf %462, %459 : vector<1x256xf32>
    %464 = arith.addf %458, %463 : vector<1x256xf32>
    %c61 = arith.constant 61 : index
    %465 = memref.load %arg1[%c61] : memref<98xf32, #tpu.memory_space<smem>>
    %466 = vector.broadcast %465 : f32 to vector<1x256xf32>
    %467 = arith.mulf %466, %460 : vector<1x256xf32>
    %468 = arith.addf %464, %467 : vector<1x256xf32>
    %c0_182 = arith.constant 0 : index
    %c37_183 = arith.constant 37 : index
    %469 = vector.load %arg9[%c0_182, %c37_183] : memref<2x358xf32, #tpu.memory_space<vmem>>, vector<1x256xf32>
    %c1_184 = arith.constant 1 : index
    %c37_185 = arith.constant 37 : index
    %470 = vector.load %arg9[%c1_184, %c37_185] : memref<2x358xf32, #tpu.memory_space<vmem>>, vector<1x256xf32>
    %c19_186 = arith.constant 19 : index
    %471 = memref.load %arg1[%c19_186] : memref<98xf32, #tpu.memory_space<smem>>
    %472 = vector.broadcast %471 : f32 to vector<1x256xf32>
    %473 = arith.mulf %472, %469 : vector<1x256xf32>
    %474 = arith.addf %468, %473 : vector<1x256xf32>
    %c68_187 = arith.constant 68 : index
    %475 = memref.load %arg1[%c68_187] : memref<98xf32, #tpu.memory_space<smem>>
    %476 = vector.broadcast %475 : f32 to vector<1x256xf32>
    %477 = arith.mulf %476, %470 : vector<1x256xf32>
    %478 = arith.addf %474, %477 : vector<1x256xf32>
    %c0_188 = arith.constant 0 : index
    %c53_189 = arith.constant 53 : index
    %479 = vector.load %arg9[%c0_188, %c53_189] : memref<2x358xf32, #tpu.memory_space<vmem>>, vector<1x256xf32>
    %c1_190 = arith.constant 1 : index
    %c53_191 = arith.constant 53 : index
    %480 = vector.load %arg9[%c1_190, %c53_191] : memref<2x358xf32, #tpu.memory_space<vmem>>, vector<1x256xf32>
    %c26 = arith.constant 26 : index
    %481 = memref.load %arg1[%c26] : memref<98xf32, #tpu.memory_space<smem>>
    %482 = vector.broadcast %481 : f32 to vector<1x256xf32>
    %483 = arith.mulf %482, %479 : vector<1x256xf32>
    %484 = arith.addf %478, %483 : vector<1x256xf32>
    %c75 = arith.constant 75 : index
    %485 = memref.load %arg1[%c75] : memref<98xf32, #tpu.memory_space<smem>>
    %486 = vector.broadcast %485 : f32 to vector<1x256xf32>
    %487 = arith.mulf %486, %480 : vector<1x256xf32>
    %488 = arith.addf %484, %487 : vector<1x256xf32>
    %c0_192 = arith.constant 0 : index
    %c69 = arith.constant 69 : index
    %489 = vector.load %arg9[%c0_192, %c69] : memref<2x358xf32, #tpu.memory_space<vmem>>, vector<1x256xf32>
    %c1_193 = arith.constant 1 : index
    %c69_194 = arith.constant 69 : index
    %490 = vector.load %arg9[%c1_193, %c69_194] : memref<2x358xf32, #tpu.memory_space<vmem>>, vector<1x256xf32>
    %c33_195 = arith.constant 33 : index
    %491 = memref.load %arg1[%c33_195] : memref<98xf32, #tpu.memory_space<smem>>
    %492 = vector.broadcast %491 : f32 to vector<1x256xf32>
    %493 = arith.mulf %492, %489 : vector<1x256xf32>
    %494 = arith.addf %488, %493 : vector<1x256xf32>
    %c82_196 = arith.constant 82 : index
    %495 = memref.load %arg1[%c82_196] : memref<98xf32, #tpu.memory_space<smem>>
    %496 = vector.broadcast %495 : f32 to vector<1x256xf32>
    %497 = arith.mulf %496, %490 : vector<1x256xf32>
    %498 = arith.addf %494, %497 : vector<1x256xf32>
    %c0_197 = arith.constant 0 : index
    %c85_198 = arith.constant 85 : index
    %499 = vector.load %arg9[%c0_197, %c85_198] : memref<2x358xf32, #tpu.memory_space<vmem>>, vector<1x256xf32>
    %c1_199 = arith.constant 1 : index
    %c85_200 = arith.constant 85 : index
    %500 = vector.load %arg9[%c1_199, %c85_200] : memref<2x358xf32, #tpu.memory_space<vmem>>, vector<1x256xf32>
    %c40 = arith.constant 40 : index
    %501 = memref.load %arg1[%c40] : memref<98xf32, #tpu.memory_space<smem>>
    %502 = vector.broadcast %501 : f32 to vector<1x256xf32>
    %503 = arith.mulf %502, %499 : vector<1x256xf32>
    %504 = arith.addf %498, %503 : vector<1x256xf32>
    %c89 = arith.constant 89 : index
    %505 = memref.load %arg1[%c89] : memref<98xf32, #tpu.memory_space<smem>>
    %506 = vector.broadcast %505 : f32 to vector<1x256xf32>
    %507 = arith.mulf %506, %500 : vector<1x256xf32>
    %508 = arith.addf %504, %507 : vector<1x256xf32>
    %c0_201 = arith.constant 0 : index
    %c101 = arith.constant 101 : index
    %509 = vector.load %arg9[%c0_201, %c101] : memref<2x358xf32, #tpu.memory_space<vmem>>, vector<1x256xf32>
    %c1_202 = arith.constant 1 : index
    %c101_203 = arith.constant 101 : index
    %510 = vector.load %arg9[%c1_202, %c101_203] : memref<2x358xf32, #tpu.memory_space<vmem>>, vector<1x256xf32>
    %c47 = arith.constant 47 : index
    %511 = memref.load %arg1[%c47] : memref<98xf32, #tpu.memory_space<smem>>
    %512 = vector.broadcast %511 : f32 to vector<1x256xf32>
    %513 = arith.mulf %512, %509 : vector<1x256xf32>
    %514 = arith.addf %508, %513 : vector<1x256xf32>
    %c96_204 = arith.constant 96 : index
    %515 = memref.load %arg1[%c96_204] : memref<98xf32, #tpu.memory_space<smem>>
    %516 = vector.broadcast %515 : f32 to vector<1x256xf32>
    %517 = arith.mulf %516, %510 : vector<1x256xf32>
    %518 = arith.addf %514, %517 : vector<1x256xf32>
    %c2_i32 = arith.constant 2 : i32
    %519 = vector.broadcast %c2_i32 : i32 to vector<1x256xi32>
    %520 = arith.addi %38, %519 : vector<1x256xi32>
    %c0_i32_205 = arith.constant 0 : i32
    %521 = vector.broadcast %c0_i32_205 : i32 to vector<1x256xi32>
    %522 = arith.cmpi sge, %520, %521 : vector<1x256xi32>
    %c2_i32_206 = arith.constant 2 : i32
    %523 = vector.broadcast %c2_i32_206 : i32 to vector<1x256xi32>
    %524 = arith.addi %38, %523 : vector<1x256xi32>
    %c16_i32_207 = arith.constant 16 : i32
    %525 = vector.broadcast %c16_i32_207 : i32 to vector<1x256xi32>
    %526 = arith.cmpi slt, %524, %525 : vector<1x256xi32>
    %527 = arith.andi %522, %526 : vector<1x256xi1>
    %528 = arith.extui %527 : vector<1x256xi1> to vector<1x256xi32>
    %529 = arith.sitofp %528 : vector<1x256xi32> to vector<1x256xf32>
    %530 = arith.mulf %518, %529 : vector<1x256xf32>
    %531 = arith.addf %447, %530 : vector<1x256xf32>
    %cst_208 = arith.constant 0.000000e+00 : f32
    %532 = vector.broadcast %cst_208 : f32 to vector<1x256xf32>
    %c0_209 = arith.constant 0 : index
    %c6 = arith.constant 6 : index
    %533 = vector.load %arg9[%c0_209, %c6] : memref<2x358xf32, #tpu.memory_space<vmem>>, vector<1x256xf32>
    %c1_210 = arith.constant 1 : index
    %c6_211 = arith.constant 6 : index
    %534 = vector.load %arg9[%c1_210, %c6_211] : memref<2x358xf32, #tpu.memory_space<vmem>>, vector<1x256xf32>
    %c6_212 = arith.constant 6 : index
    %535 = memref.load %arg1[%c6_212] : memref<98xf32, #tpu.memory_space<smem>>
    %536 = vector.broadcast %535 : f32 to vector<1x256xf32>
    %537 = arith.mulf %536, %533 : vector<1x256xf32>
    %538 = arith.addf %532, %537 : vector<1x256xf32>
    %c55 = arith.constant 55 : index
    %539 = memref.load %arg1[%c55] : memref<98xf32, #tpu.memory_space<smem>>
    %540 = vector.broadcast %539 : f32 to vector<1x256xf32>
    %541 = arith.mulf %540, %534 : vector<1x256xf32>
    %542 = arith.addf %538, %541 : vector<1x256xf32>
    %c0_213 = arith.constant 0 : index
    %c22_214 = arith.constant 22 : index
    %543 = vector.load %arg9[%c0_213, %c22_214] : memref<2x358xf32, #tpu.memory_space<vmem>>, vector<1x256xf32>
    %c1_215 = arith.constant 1 : index
    %c22_216 = arith.constant 22 : index
    %544 = vector.load %arg9[%c1_215, %c22_216] : memref<2x358xf32, #tpu.memory_space<vmem>>, vector<1x256xf32>
    %c13 = arith.constant 13 : index
    %545 = memref.load %arg1[%c13] : memref<98xf32, #tpu.memory_space<smem>>
    %546 = vector.broadcast %545 : f32 to vector<1x256xf32>
    %547 = arith.mulf %546, %543 : vector<1x256xf32>
    %548 = arith.addf %542, %547 : vector<1x256xf32>
    %c62 = arith.constant 62 : index
    %549 = memref.load %arg1[%c62] : memref<98xf32, #tpu.memory_space<smem>>
    %550 = vector.broadcast %549 : f32 to vector<1x256xf32>
    %551 = arith.mulf %550, %544 : vector<1x256xf32>
    %552 = arith.addf %548, %551 : vector<1x256xf32>
    %c0_217 = arith.constant 0 : index
    %c38_218 = arith.constant 38 : index
    %553 = vector.load %arg9[%c0_217, %c38_218] : memref<2x358xf32, #tpu.memory_space<vmem>>, vector<1x256xf32>
    %c1_219 = arith.constant 1 : index
    %c38_220 = arith.constant 38 : index
    %554 = vector.load %arg9[%c1_219, %c38_220] : memref<2x358xf32, #tpu.memory_space<vmem>>, vector<1x256xf32>
    %c20_221 = arith.constant 20 : index
    %555 = memref.load %arg1[%c20_221] : memref<98xf32, #tpu.memory_space<smem>>
    %556 = vector.broadcast %555 : f32 to vector<1x256xf32>
    %557 = arith.mulf %556, %553 : vector<1x256xf32>
    %558 = arith.addf %552, %557 : vector<1x256xf32>
    %c69_222 = arith.constant 69 : index
    %559 = memref.load %arg1[%c69_222] : memref<98xf32, #tpu.memory_space<smem>>
    %560 = vector.broadcast %559 : f32 to vector<1x256xf32>
    %561 = arith.mulf %560, %554 : vector<1x256xf32>
    %562 = arith.addf %558, %561 : vector<1x256xf32>
    %c0_223 = arith.constant 0 : index
    %c54_224 = arith.constant 54 : index
    %563 = vector.load %arg9[%c0_223, %c54_224] : memref<2x358xf32, #tpu.memory_space<vmem>>, vector<1x256xf32>
    %c1_225 = arith.constant 1 : index
    %c54_226 = arith.constant 54 : index
    %564 = vector.load %arg9[%c1_225, %c54_226] : memref<2x358xf32, #tpu.memory_space<vmem>>, vector<1x256xf32>
    %c27 = arith.constant 27 : index
    %565 = memref.load %arg1[%c27] : memref<98xf32, #tpu.memory_space<smem>>
    %566 = vector.broadcast %565 : f32 to vector<1x256xf32>
    %567 = arith.mulf %566, %563 : vector<1x256xf32>
    %568 = arith.addf %562, %567 : vector<1x256xf32>
    %c76 = arith.constant 76 : index
    %569 = memref.load %arg1[%c76] : memref<98xf32, #tpu.memory_space<smem>>
    %570 = vector.broadcast %569 : f32 to vector<1x256xf32>
    %571 = arith.mulf %570, %564 : vector<1x256xf32>
    %572 = arith.addf %568, %571 : vector<1x256xf32>
    %c0_227 = arith.constant 0 : index
    %c70_228 = arith.constant 70 : index
    %573 = vector.load %arg9[%c0_227, %c70_228] : memref<2x358xf32, #tpu.memory_space<vmem>>, vector<1x256xf32>
    %c1_229 = arith.constant 1 : index
    %c70_230 = arith.constant 70 : index
    %574 = vector.load %arg9[%c1_229, %c70_230] : memref<2x358xf32, #tpu.memory_space<vmem>>, vector<1x256xf32>
    %c34_231 = arith.constant 34 : index
    %575 = memref.load %arg1[%c34_231] : memref<98xf32, #tpu.memory_space<smem>>
    %576 = vector.broadcast %575 : f32 to vector<1x256xf32>
    %577 = arith.mulf %576, %573 : vector<1x256xf32>
    %578 = arith.addf %572, %577 : vector<1x256xf32>
    %c83_232 = arith.constant 83 : index
    %579 = memref.load %arg1[%c83_232] : memref<98xf32, #tpu.memory_space<smem>>
    %580 = vector.broadcast %579 : f32 to vector<1x256xf32>
    %581 = arith.mulf %580, %574 : vector<1x256xf32>
    %582 = arith.addf %578, %581 : vector<1x256xf32>
    %c0_233 = arith.constant 0 : index
    %c86_234 = arith.constant 86 : index
    %583 = vector.load %arg9[%c0_233, %c86_234] : memref<2x358xf32, #tpu.memory_space<vmem>>, vector<1x256xf32>
    %c1_235 = arith.constant 1 : index
    %c86_236 = arith.constant 86 : index
    %584 = vector.load %arg9[%c1_235, %c86_236] : memref<2x358xf32, #tpu.memory_space<vmem>>, vector<1x256xf32>
    %c41 = arith.constant 41 : index
    %585 = memref.load %arg1[%c41] : memref<98xf32, #tpu.memory_space<smem>>
    %586 = vector.broadcast %585 : f32 to vector<1x256xf32>
    %587 = arith.mulf %586, %583 : vector<1x256xf32>
    %588 = arith.addf %582, %587 : vector<1x256xf32>
    %c90 = arith.constant 90 : index
    %589 = memref.load %arg1[%c90] : memref<98xf32, #tpu.memory_space<smem>>
    %590 = vector.broadcast %589 : f32 to vector<1x256xf32>
    %591 = arith.mulf %590, %584 : vector<1x256xf32>
    %592 = arith.addf %588, %591 : vector<1x256xf32>
    %c0_237 = arith.constant 0 : index
    %c102 = arith.constant 102 : index
    %593 = vector.load %arg9[%c0_237, %c102] : memref<2x358xf32, #tpu.memory_space<vmem>>, vector<1x256xf32>
    %c1_238 = arith.constant 1 : index
    %c102_239 = arith.constant 102 : index
    %594 = vector.load %arg9[%c1_238, %c102_239] : memref<2x358xf32, #tpu.memory_space<vmem>>, vector<1x256xf32>
    %c48_240 = arith.constant 48 : index
    %595 = memref.load %arg1[%c48_240] : memref<98xf32, #tpu.memory_space<smem>>
    %596 = vector.broadcast %595 : f32 to vector<1x256xf32>
    %597 = arith.mulf %596, %593 : vector<1x256xf32>
    %598 = arith.addf %592, %597 : vector<1x256xf32>
    %c97_241 = arith.constant 97 : index
    %599 = memref.load %arg1[%c97_241] : memref<98xf32, #tpu.memory_space<smem>>
    %600 = vector.broadcast %599 : f32 to vector<1x256xf32>
    %601 = arith.mulf %600, %594 : vector<1x256xf32>
    %602 = arith.addf %598, %601 : vector<1x256xf32>
    %c3_i32 = arith.constant 3 : i32
    %603 = vector.broadcast %c3_i32 : i32 to vector<1x256xi32>
    %604 = arith.addi %38, %603 : vector<1x256xi32>
    %c0_i32_242 = arith.constant 0 : i32
    %605 = vector.broadcast %c0_i32_242 : i32 to vector<1x256xi32>
    %606 = arith.cmpi sge, %604, %605 : vector<1x256xi32>
    %c3_i32_243 = arith.constant 3 : i32
    %607 = vector.broadcast %c3_i32_243 : i32 to vector<1x256xi32>
    %608 = arith.addi %38, %607 : vector<1x256xi32>
    %c16_i32_244 = arith.constant 16 : i32
    %609 = vector.broadcast %c16_i32_244 : i32 to vector<1x256xi32>
    %610 = arith.cmpi slt, %608, %609 : vector<1x256xi32>
    %611 = arith.andi %606, %610 : vector<1x256xi1>
    %612 = arith.extui %611 : vector<1x256xi1> to vector<1x256xi32>
    %613 = arith.sitofp %612 : vector<1x256xi32> to vector<1x256xf32>
    %614 = arith.mulf %602, %613 : vector<1x256xf32>
    %615 = arith.addf %531, %614 : vector<1x256xf32>
    %616 = arith.negf %615 : vector<1x256xf32>
    %617 = math.exp %616 : vector<1x256xf32>
    %cst_245 = arith.constant 1.000000e+00 : f32
    %618 = vector.broadcast %cst_245 : f32 to vector<1x256xf32>
    %619 = arith.addf %618, %617 : vector<1x256xf32>
    %620 = arith.divf %618, %619 : vector<1x256xf32>
    %621 = arith.addf %1, %3 : vector<4x256xf32>
    %622 = vector.broadcast %620 : vector<1x256xf32> to vector<4x256xf32>
    %623 = arith.mulf %622, %621 : vector<4x256xf32>
    %c0_246 = arith.constant 0 : index
    %c0_247 = arith.constant 0 : index
    %c0_248 = arith.constant 0 : index
    %624 = vector.load %arg8[%c0_246, %c0_247, %c0_248] : memref<1x4x256xf32, #tpu.memory_space<vmem>>, vector<1x4x256xf32>
    %625 = vector.shape_cast %624 : vector<1x4x256xf32> to vector<4x256xf32>
    %626 = vector.shape_cast %623 : vector<4x256xf32> to vector<1x4x256xf32>
    tpu.vector_store %arg8[%c0_246, %c0_247, %c0_248], %626 {strides = array<i32>} : memref<1x4x256xf32, #tpu.memory_space<vmem>>, vector<1x4x256xf32>,
    return
  }
  func.func @transform_0(%arg0: i32) -> i32 {
    %c0_i32 = arith.constant 0 : i32
    %c0_i32_0 = arith.constant 0 : i32
    return %c0_i32 : i32
  }
  func.func @transform_1(%arg0: i32) -> (i32, i32) {
    %c0_i32 = arith.constant 0 : i32
    %c0_i32_0 = arith.constant 0 : i32
    %c0_i32_1 = arith.constant 0 : i32
    return %c0_i32, %c0_i32_0 : i32, i32
  }
  func.func @transform_2(%arg0: i32) -> (i32, i32) {
    %c0_i32 = arith.constant 0 : i32
    %c0_i32_0 = arith.constant 0 : i32
    %c0_i32_1 = arith.constant 0 : i32
    return %c0_i32, %c0_i32_0 : i32, i32
  }
  func.func @transform_3(%arg0: i32) -> (i32, i32) {
    %c0_i32 = arith.constant 0 : i32
    %c0_i32_0 = arith.constant 0 : i32
    %c0_i32_1 = arith.constant 0 : i32
    return %c0_i32, %c0_i32_0 : i32, i32
  }
  func.func @transform_4(%arg0: i32) -> (i32, i32) {
    %c0_i32 = arith.constant 0 : i32
    %c0_i32_0 = arith.constant 0 : i32
    %c0_i32_1 = arith.constant 0 : i32
    return %c0_i32, %c0_i32_0 : i32, i32
  }
  func.func @transform_5(%arg0: i32) -> (i32, i32, i32) {
    %c0_i32 = arith.constant 0 : i32
    %c0_i32_0 = arith.constant 0 : i32
    %c0_i32_1 = arith.constant 0 : i32
    return %arg0, %c0_i32, %c0_i32_0 : i32, i32, i32
  }
  func.func @transform_6(%arg0: i32) -> (i32, i32, i32) {
    %c0_i32 = arith.constant 0 : i32
    %c0_i32_0 = arith.constant 0 : i32
    %c0_i32_1 = arith.constant 0 : i32
    return %arg0, %c0_i32, %c0_i32_0 : i32, i32, i32
  }
  func.func @transform_7(%arg0: i32) -> (i32, i32, i32) {
    %c0_i32 = arith.constant 0 : i32
    %c0_i32_0 = arith.constant 0 : i32
    %c0_i32_1 = arith.constant 0 : i32
    return %arg0, %c0_i32, %c0_i32_0 : i32, i32, i32
  }
}

</mosaic_0001>

<llo_original>
// kernel: tpu_custom_call.1
$region0: #{tpu_custom_call.1}
  #allocation0 [shape = 'u32[]', space=smem, size = 0x4, offset = 0x4, fixed_abs, tag = 'smem constant byte address 0x4 - core index']
  #allocation1 [shape = 'u32[144,128]{1,0:T(1,128)}', space=vmem, size = 0x12000, scoped, tag = 'internal scratch']
  #allocation2 [shape = 'f32[2,358]{1,0:T(2,128)}', space=vmem, size = 0xc00, scoped, tag = 'scratch operand']
  %s0 = inlined_call_operand.vmem [shape: f32[98], index: 0, kind: input, shape index: {}]
  %s1 = inlined_call_operand.vmem [shape: f32[8,4], index: 1, kind: input, shape index: {}]
  %s2 = inlined_call_operand.vmem [shape: f32[8,1], index: 2, kind: input, shape index: {}]
  %s3 = inlined_call_operand.vmem [shape: f32[8,4], index: 3, kind: input, shape index: {}]
  %s4 = inlined_call_operand.vmem [shape: f32[8,1], index: 4, kind: input, shape index: {}]
  %s5 = inlined_call_operand.vmem [shape: f32[2,4,256], index: 5, kind: input, shape index: {}]
  %s6 = inlined_call_operand.vmem [shape: f32[2,4,256], index: 6, kind: input, shape index: {}]
  %s7 = inlined_call_operand.hbm [shape: f32[2,4,256], index: 7, kind: output, shape index: {}]
  %s8 = sld [smem:[#allocation0]]
  $region65: #{tpu_custom_call.1} parent=0
    _
  %s10 = ssub.s32 1, %s8
  %s11 = scalar_select 0, %s10, %s8
  $region1: #{tpu_custom_call.1} parent=0
    #allocation3 [shape = 'u8[512]{0}', space=smem, size = 0x200, scoped, tag = 'input window, operand 0, single buffered']
    #allocation4 [shape = 's32[2]{0}', space=sflag, size = 0x8, scoped, tag = 'scoped memory for tpu_custom_call.1']
    #allocation5 [shape = 's32[2]{0}', space=sflag, size = 0x8, scoped, tag = 'scoped memory for tpu_custom_call.1']
    #allocation6 [shape = 'u8[8192]{0}', space=vmem, size = 0x2000, scoped, tag = 'output window, operand 0']
    %12 = vsyncpa [#allocation5], 0
    %13 = vsyncpa [#allocation4], 0
    %s14 = scalar_lea.sflag [#allocation4], 1
    %15 = vsyncpa %s14, 0
    loop: start=0, step=1, limit=4
    $region2: #{tpu_custom_call.1} parent=1 // loop_pre_header
      _
    $region3: #{tpu_custom_call.1} parent=1 // loop_header
      %s17 = sphi 0, %s21
      %p18 = scmp.ge.s32.totalorder %s17, 4
      %s25 = sphi 0, %s25
      %s27 = sphi 0, %s25
      %s28 = sphi 0, %s27
      %s42 = sphi 0, %s28
      %s46 = sphi 0, %s46
      %s48 = sphi 0, %s46
      %s49 = sphi 0, %s48
      %s63 = sphi 0, %s49
      %s67 = sphi 0, %s67
      %s69 = sphi 0, %s67
      %s70 = sphi 0, %s69
      %s84 = sphi 0, %s70
      %s88 = sphi 0, %s88
      %s90 = sphi 0, %s88
      %s91 = sphi 0, %s90
      %s105 = sphi 0, %s91
      %s109 = sphi 0, %s109
      %s111 = sphi 0, %s109
      %s112 = sphi 0, %s111
      %s126 = sphi 0, %s112
      %s132 = sphi 0, %s134
      %s135 = sphi 0, %s132
      %s136 = sphi 0, %s135
      %s152 = sphi 0, %s136
      %s158 = sphi 0, %s160
      %s161 = sphi 0, %s158
      %s162 = sphi 0, %s161
      %s178 = sphi 0, %s162
      %s184 = sphi 0, %s186
      %s187 = sphi 0, %s184
      %s188 = sphi 0, %s187
      %s204 = sphi 0, %s188
    $region4: #{tpu_custom_call.1} parent=1 // loop_header_branch
      %20 = sbr.rel (%p18) target = $region8
    $region5: #{tpu_custom_call.1} parent=1 // loop_body
      %s22 = ssub.s32 %s17, 1
      %s23 = ssub.s32 %s17, 2
      %s24 = sadd.s32 %s17, 1
      %s26 = sadd.s32 %s25, 1
      %p29 = scmp.eq.s32.totalorder %s17, 1
      %p30 = scmp.ne.s32.totalorder %s25, %s27
      %p31 = scmp.eq.s32.totalorder %s17, 0
      %p32 = por %p30, %p31
      %p33 = scmp.ne.s32.totalorder %s25, %s27
      %p34 = scmp.eq.s32.totalorder %s22, 1
      %p35 = por %p33, %p34
      %p36 = scmp.ne.s32.totalorder %s27, %s28
      %p37 = scmp.eq.s32.totalorder %s22, 0
      %p38 = por %p36, %p37
      %p39 = scmp.ne.s32.totalorder %s27, %s28
      %p40 = scmp.eq.s32.totalorder %s23, 1
      %p41 = por %p39, %p40
      %p43 = scmp.ne.s32.totalorder %s28, %s42
      %p44 = scmp.eq.s32.totalorder %s23, 0
      %p45 = por %p43, %p44
      %s47 = sadd.s32 %s46, 1
      %p50 = scmp.eq.s32.totalorder %s17, 1
      %p51 = scmp.ne.s32.totalorder %s46, %s48
      %p52 = scmp.eq.s32.totalorder %s17, 0
      %p53 = por %p51, %p52
      %p54 = scmp.ne.s32.totalorder %s46, %s48
      %p55 = scmp.eq.s32.totalorder %s22, 1
      %p56 = por %p54, %p55
      %p57 = scmp.ne.s32.totalorder %s48, %s49
      %p58 = scmp.eq.s32.totalorder %s22, 0
      %p59 = por %p57, %p58
      %p60 = scmp.ne.s32.totalorder %s48, %s49
      %p61 = scmp.eq.s32.totalorder %s23, 1
      %p62 = por %p60, %p61
      %p64 = scmp.ne.s32.totalorder %s49, %s63
      %p65 = scmp.eq.s32.totalorder %s23, 0
      %p66 = por %p64, %p65
      %s68 = sadd.s32 %s67, 1
      %p71 = scmp.eq.s32.totalorder %s17, 1
      %p72 = scmp.ne.s32.totalorder %s67, %s69
      %p73 = scmp.eq.s32.totalorder %s17, 0
      %p74 = por %p72, %p73
      %p75 = scmp.ne.s32.totalorder %s67, %s69
      %p76 = scmp.eq.s32.totalorder %s22, 1
      %p77 = por %p75, %p76
      %p78 = scmp.ne.s32.totalorder %s69, %s70
      %p79 = scmp.eq.s32.totalorder %s22, 0
      %p80 = por %p78, %p79
      %p81 = scmp.ne.s32.totalorder %s69, %s70
      %p82 = scmp.eq.s32.totalorder %s23, 1
      %p83 = por %p81, %p82
      %p85 = scmp.ne.s32.totalorder %s70, %s84
      %p86 = scmp.eq.s32.totalorder %s23, 0
      %p87 = por %p85, %p86
      %s89 = sadd.s32 %s88, 1
      %p92 = scmp.eq.s32.totalorder %s17, 1
      %p93 = scmp.ne.s32.totalorder %s88, %s90
      %p94 = scmp.eq.s32.totalorder %s17, 0
      %p95 = por %p93, %p94
      %p96 = scmp.ne.s32.totalorder %s88, %s90
      %p97 = scmp.eq.s32.totalorder %s22, 1
      %p98 = por %p96, %p97
      %p99 = scmp.ne.s32.totalorder %s90, %s91
      %p100 = scmp.eq.s32.totalorder %s22, 0
      %p101 = por %p99, %p100
      %p102 = scmp.ne.s32.totalorder %s90, %s91
      %p103 = scmp.eq.s32.totalorder %s23, 1
      %p104 = por %p102, %p103
      %p106 = scmp.ne.s32.totalorder %s91, %s105
      %p107 = scmp.eq.s32.totalorder %s23, 0
      %p108 = por %p106, %p107
      %s110 = sadd.s32 %s109, 1
      %p113 = scmp.eq.s32.totalorder %s17, 1
      %p114 = scmp.ne.s32.totalorder %s109, %s111
      %p115 = scmp.eq.s32.totalorder %s17, 0
      %p116 = por %p114, %p115
      %p117 = scmp.ne.s32.totalorder %s109, %s111
      %p118 = scmp.eq.s32.totalorder %s22, 1
      %p119 = por %p117, %p118
      %p120 = scmp.ne.s32.totalorder %s111, %s112
      %p121 = scmp.eq.s32.totalorder %s22, 0
      %p122 = por %p120, %p121
      %p123 = scmp.ne.s32.totalorder %s111, %s112
      %p124 = scmp.eq.s32.totalorder %s23, 1
      %p125 = por %p123, %p124
      %p127 = scmp.ne.s32.totalorder %s112, %s126
      %p128 = scmp.eq.s32.totalorder %s23, 0
      %p129 = por %p127, %p128
      %s130 = ssub.s32 %s17, %s24
      %p131 = scmp.eq.s32.totalorder %s130, 0
      %s133 = sadd.s32 %s132, 1
      %s134 = scalar_select %p131, %s132, %s133
      %p137 = pneg %p131
      %p138 = scmp.eq.s32.totalorder %s17, 1
      %p139 = por %p137, %p138
      %p140 = scmp.ne.s32.totalorder %s132, %s135
      %p141 = scmp.eq.s32.totalorder %s17, 0
      %p142 = por %p140, %p141
      %p143 = scmp.ne.s32.totalorder %s132, %s135
      %p144 = scmp.eq.s32.totalorder %s22, 1
      %p145 = por %p143, %p144
      %p146 = scmp.ne.s32.totalorder %s135, %s136
      %p147 = scmp.eq.s32.totalorder %s22, 0
      %p148 = por %p146, %p147
      %p149 = scmp.ne.s32.totalorder %s135, %s136
      %p150 = scmp.eq.s32.totalorder %s23, 1
      %p151 = por %p149, %p150
      %p153 = scmp.ne.s32.totalorder %s136, %s152
      %p154 = scmp.eq.s32.totalorder %s23, 0
      %p155 = por %p153, %p154
      %s156 = ssub.s32 %s17, %s24
      %p157 = scmp.eq.s32.totalorder %s156, 0
      %s159 = sadd.s32 %s158, 1
      %s160 = scalar_select %p157, %s158, %s159
      %p163 = pneg %p157
      %p164 = scmp.eq.s32.totalorder %s17, 1
      %p165 = por %p163, %p164
      %p166 = scmp.ne.s32.totalorder %s158, %s161
      %p167 = scmp.eq.s32.totalorder %s17, 0
      %p168 = por %p166, %p167
      %p169 = scmp.ne.s32.totalorder %s158, %s161
      %p170 = scmp.eq.s32.totalorder %s22, 1
      %p171 = por %p169, %p170
      %p172 = scmp.ne.s32.totalorder %s161, %s162
      %p173 = scmp.eq.s32.totalorder %s22, 0
      %p174 = por %p172, %p173
      %p175 = scmp.ne.s32.totalorder %s161, %s162
      %p176 = scmp.eq.s32.totalorder %s23, 1
      %p177 = por %p175, %p176
      %p179 = scmp.ne.s32.totalorder %s162, %s178
      %p180 = scmp.eq.s32.totalorder %s23, 0
      %p181 = por %p179, %p180
      %s182 = ssub.s32 %s17, %s24
      %p183 = scmp.eq.s32.totalorder %s182, 0
      %s185 = sadd.s32 %s184, 1
      %s186 = scalar_select %p183, %s184, %s185
      %p189 = pneg %p183
      %p190 = scmp.eq.s32.totalorder %s17, 1
      %p191 = por %p189, %p190
      %p192 = scmp.ne.s32.totalorder %s184, %s187
      %p193 = scmp.eq.s32.totalorder %s17, 0
      %p194 = por %p192, %p193
      %p195 = scmp.ne.s32.totalorder %s184, %s187
      %p196 = scmp.eq.s32.totalorder %s22, 1
      %p197 = por %p195, %p196
      %p198 = scmp.ne.s32.totalorder %s187, %s188
      %p199 = scmp.eq.s32.totalorder %s22, 0
      %p200 = por %p198, %p199
      %p201 = scmp.ne.s32.totalorder %s187, %s188
      %p202 = scmp.eq.s32.totalorder %s23, 1
      %p203 = por %p201, %p202
      %p205 = scmp.ne.s32.totalorder %s188, %s204
      %p206 = scmp.eq.s32.totalorder %s23, 0
      %p207 = por %p205, %p206
      %p208 = scmp.le.s32.totalorder 1, %s17
      %p209 = scmp.lt.s32.totalorder %s17, 3
      %p210 = pnand %p208, %p209
      %p211 = pneg %p210
      // Predicated region
      $region9: #{tpu_custom_call.1} parent=5 // pred_check
        _
      $region10: #{tpu_custom_call.1} parent=5 // pred_check_branch
        %213 = sbr.rel (%p210) target = $region12
      $region11: #{tpu_custom_call.1} parent=5 // pred_region
        %s214 = ssub.s32 %s17, 1
        // Predicated region
        $region13: #{tpu_custom_call.1} parent=11 // pred_check
          %p215 = pneg %p38
        $region14: #{tpu_custom_call.1} parent=11 // pred_check_branch
          %217 = sbr.rel (%p215) target = $region16
        $region15: #{tpu_custom_call.1} parent=11 // pred_region
          %s219 = ssub.s32 16, 16
          %220 = vsyncadd [#allocation5], %s219
          %s222 = sshll.u32 %s0, 4
          %s223 = int_to_ptr.vmem [resolvable:$true] %s222
          %225 = dma.vmem_to_smem %s223, 16, [#allocation3], [#allocation5]
        $region16: #{tpu_custom_call.1} parent=11 // pred_fallthru
          _
        // Predicated region
        $region17: #{tpu_custom_call.1} parent=11 // pred_check
          %p226 = pneg %p59
        $region18: #{tpu_custom_call.1} parent=11 // pred_check_branch
          %228 = sbr.rel (%p226) target = $region20
        $region19: #{tpu_custom_call.1} parent=11 // pred_region
          _
        $region20: #{tpu_custom_call.1} parent=11 // pred_fallthru
          _
        // Predicated region
        $region21: #{tpu_custom_call.1} parent=11 // pred_check
          %p229 = pneg %p80
        $region22: #{tpu_custom_call.1} parent=11 // pred_check_branch
          %231 = sbr.rel (%p229) target = $region24
        $region23: #{tpu_custom_call.1} parent=11 // pred_region
          _
        $region24: #{tpu_custom_call.1} parent=11 // pred_fallthru
          _
        // Predicated region
        $region25: #{tpu_custom_call.1} parent=11 // pred_check
          %p232 = pneg %p101
        $region26: #{tpu_custom_call.1} parent=11 // pred_check_branch
          %234 = sbr.rel (%p232) target = $region28
        $region27: #{tpu_custom_call.1} parent=11 // pred_region
          _
        $region28: #{tpu_custom_call.1} parent=11 // pred_fallthru
          _
        // Predicated region
        $region29: #{tpu_custom_call.1} parent=11 // pred_check
          %p235 = pneg %p122
        $region30: #{tpu_custom_call.1} parent=11 // pred_check_branch
          %237 = sbr.rel (%p235) target = $region32
        $region31: #{tpu_custom_call.1} parent=11 // pred_region
          _
        $region32: #{tpu_custom_call.1} parent=11 // pred_fallthru
          _
      $region12: #{tpu_custom_call.1} parent=5 // pred_fallthru
        _
      %p238 = scmp.lt.s32.totalorder %s17, 2
      // Predicated region
      $region33: #{tpu_custom_call.1} parent=5 // pred_check
        %p239 = pneg %p238
      $region34: #{tpu_custom_call.1} parent=5 // pred_check_branch
        %241 = sbr.rel (%p239) target = $region36
      $region35: #{tpu_custom_call.1} parent=5 // pred_region
        // Predicated region
        $region37: #{tpu_custom_call.1} parent=35 // pred_check
          %p242 = pneg %p142
        $region38: #{tpu_custom_call.1} parent=35 // pred_check_branch
          %244 = sbr.rel (%p242) target = $region40
        $region39: #{tpu_custom_call.1} parent=35 // pred_region
          %p245 = scmp.lt.s32.totalorder %s17, 1
          %s246 = scalar_select %p245, %s17, 1
          %s247 = smul.addr %s246, 2
          %s248 = smul.addr %s247, 4
          %s249 = scalar_lea.vmem %s5, %s248
        $region40: #{tpu_custom_call.1} parent=35 // pred_fallthru
          _
        // Predicated region
        $region41: #{tpu_custom_call.1} parent=35 // pred_check
          %p250 = pneg %p168
        $region42: #{tpu_custom_call.1} parent=35 // pred_check_branch
          %252 = sbr.rel (%p250) target = $region44
        $region43: #{tpu_custom_call.1} parent=35 // pred_region
          %p253 = scmp.lt.s32.totalorder %s17, 1
          %s254 = scalar_select %p253, %s17, 1
          %s255 = smul.addr %s254, 2
          %s256 = smul.addr %s255, 4
          %s257 = scalar_lea.vmem %s6, %s256
        $region44: #{tpu_custom_call.1} parent=35 // pred_fallthru
          _
      $region36: #{tpu_custom_call.1} parent=5 // pred_fallthru
        _
      %p258 = scmp.le.s32.totalorder 1, %s17
      %p259 = scmp.lt.s32.totalorder %s17, 3
      %p260 = pnand %p258, %p259
      %p261 = pneg %p260
      // Predicated region
      $region45: #{tpu_custom_call.1} parent=5 // pred_check
        _
      $region46: #{tpu_custom_call.1} parent=5 // pred_check_branch
        %263 = sbr.rel (%p260) target = $region48
      $region47: #{tpu_custom_call.1} parent=5 // pred_region
        %s264 = ssub.s32 %s17, 1
        // Predicated region
        $region49: #{tpu_custom_call.1} parent=47 // pred_check
          %p265 = pneg %p38
        $region50: #{tpu_custom_call.1} parent=47 // pred_check_branch
          %267 = sbr.rel (%p265) target = $region52
        $region51: #{tpu_custom_call.1} parent=47 // pred_region
          %268 = dma.done [#allocation5], 16
        $region52: #{tpu_custom_call.1} parent=47 // pred_fallthru
          _
        %269 = sfence
        %p270 = pneg %p38
        %p271 = pneg %p35
        %p272 = pneg %p59
        %p273 = pneg %p56
        %p274 = pneg %p80
        %p275 = pneg %p77
        %p276 = pneg %p101
        %p277 = pneg %p98
        %p278 = pneg %p122
        %p279 = pneg %p119
        %p280 = scmp.lt.s32.totalorder %s22, 1
        %s281 = scalar_select %p280, %s22, 1
        %s282 = smul.addr %s281, 2
        %s283 = smul.addr %s282, 4
        %s284 = scalar_lea.vmem %s5, %s283
        %p285 = pneg %p148
        %p286 = pneg %p145
        %p287 = scmp.lt.s32.totalorder %s22, 1
        %s288 = scalar_select %p287, %s22, 1
        %s289 = smul.addr %s288, 2
        %s290 = smul.addr %s289, 4
        %s291 = scalar_lea.vmem %s6, %s290
        %p292 = pneg %p174
        %p293 = pneg %p171
        %p294 = pneg %p200
        %p295 = pneg %p197
        %s296 = sand.u32 %s187, 1
        %s297 = scalar_lea.sflag [#allocation4], %s296
        %s298 = sand.u32 %s187, 1
        %s299 = smul.addr %s298, 8
        %s300 = scalar_lea.vmem [#allocation6], %s299
        %p301 = scmp.lt.s32.totalorder %s22, 1
        %s302 = scalar_select %p301, %s22, 1
        %s303 = smul.addr %s302, 2
        %s304 = smul.addr %s303, 4
        %s305 = scalar_lea.vmem %s5, %s304
        %p306 = scmp.lt.s32.totalorder %s22, 1
        %s307 = scalar_select %p306, %s22, 1
        %s308 = smul.addr %s307, 2
        %s309 = smul.addr %s308, 4
        %s310 = scalar_lea.vmem %s6, %s309
        %v311 = vld [vmem:[%s305] sm:$0xff]
        %v312 = vld [vmem:[%s310] sm:$0xff]
        %v313 = vld [vmem:[%s1] sm:$0xff]
        %v314 = vld [vmem:[%s2] sm:$0xff]
        %316 = vset.pattern.permute.xlu0 0
        %317 = vperm.xlu0 %316, %v314
        %v318 = vpop.permute.xlu0 %317
        %v321 = vcombine.high %v311, %v311
        %vm322 = vcmask 31744
        %v324 = vsel %vm322, %v313, 0
        %vm326 = vcmask 1043456
        %v327 = vsel %vm326, %v311, 0
        %v329 = vsel %vm326, %v321, 0
        %331 = vmatprep.subr.mxu0 %v329
        %332 = vmatpush1.msra.mxu0 %v327
        %333 = vmatprep.subr.mxu0 0.0
        %334 = vmatpush1.msra.mxu0 0.0
        %335 = vmatprep.subr.mxu0 0.0
        %336 = vmatpush1.msra.mxu0 0.0
        %337 = vmatprep.subr.mxu0 0.0
        %338 = vmatpush1.msra.mxu0 0.0
        %339 = vmatprep.subr.mxu0 0.0
        %340 = vmatpush1.msra.mxu0 0.0
        %341 = vmatprep.subr.mxu0 0.0
        %342 = vmatpush1.msra.mxu0 0.0
        %343 = vmatprep.subr.mxu0 0.0
        %344 = vmatpush1.msra.mxu0 0.0
        %345 = vmatprep.subr.mxu0 0.0
        %346 = vmatpush1.msra.mxu0 0.0
        %347 = vmatprep.subr.mxu0 0.0
        %348 = vmatpush1.msra.mxu0 0.0
        %349 = vmatprep.subr.mxu0 0.0
        %350 = vmatpush1.msra.mxu0 0.0
        %351 = vmatprep.subr.mxu0 0.0
        %352 = vmatpush1.msra.mxu0 0.0
        %353 = vmatprep.subr.mxu0 0.0
        %354 = vmatpush1.msra.mxu0 0.0
        %355 = vmatprep.subr.mxu0 0.0
        %356 = vmatpush1.msra.mxu0 0.0
        %357 = vmatprep.subr.mxu0 0.0
        %358 = vmatpush1.msra.mxu0 0.0
        %359 = vmatprep.subr.mxu0 0.0
        %360 = vmatpush1.msra.mxu0 0.0
        %361 = vmatprep.subr.mxu0 0.0
        %362 = vmatpush1.msra.mxu0 0.0
        %363 = vmatprep.subr.mxu0 0.0
        %364 = vmatpush1.msra.mxu0 0.0
        %365 = vmatprep.subr.mxu0 0.0
        %366 = vmatpush1.msra.mxu0 0.0
        %367 = vmatprep.subr.mxu0 0.0
        %368 = vmatpush1.msra.mxu0 0.0
        %369 = vmatprep.subr.mxu0 0.0
        %370 = vmatpush1.msra.mxu0 0.0
        %371 = vmatprep.subr.mxu0 0.0
        %372 = vmatpush1.msra.mxu0 0.0
        %373 = vmatprep.subr.mxu0 0.0
        %374 = vmatpush1.msra.mxu0 0.0
        %375 = vmatprep.subr.mxu0 0.0
        %376 = vmatpush1.msra.mxu0 0.0
        %377 = vmatprep.subr.mxu0 0.0
        %378 = vmatpush1.msra.mxu0 0.0
        %379 = vmatprep.subr.mxu0 0.0
        %380 = vmatpush1.msra.mxu0 0.0
        %381 = vmatprep.subr.mxu0 0.0
        %382 = vmatpush1.msra.mxu0 0.0
        %383 = vmatprep.subr.mxu0 0.0
        %384 = vmatpush1.msra.mxu0 0.0
        %385 = vmatprep.subr.mxu0 0.0
        %386 = vmatpush1.msra.mxu0 0.0
        %387 = vmatprep.subr.mxu0 0.0
        %388 = vmatpush1.msra.mxu0 0.0
        %389 = vmatprep.subr.mxu0 0.0
        %390 = vmatpush1.msra.mxu0 0.0
        %391 = vmatprep.subr.mxu0 0.0
        %392 = vmatpush1.msra.mxu0 0.0
        %393 = vmatprep.subr.mxu0 0.0
        %394 = vmatpush1.msra.mxu0 0.0
        %395 = vmatprep.mubr.f32.mxu0 0.0
        %396 = vmatmul.mubr.f32.gmra.mrb[0].mxu0 %v324
        %v397 = vpop.f32.mrb[0].mxu0
        %v398 = vadd.f32 %v318, %v397
        %v399 = vpop.f32.mrb[0].mxu0
        %v400 = vadd.f32 %v318, %v399
        %401 = vdwg.mxu0
        %v402 = vld [vmem:[%s3] sm:$0xff]
        %v403 = vld [vmem:[%s4] sm:$0xff]
        %405 = vset.pattern.permute.xlu0 0
        %406 = vperm.xlu0 %405, %v403
        %v407 = vpop.permute.xlu0 %406
        %v410 = vcombine.high %v312, %v312
        %v412 = vsel %vm322, %v402, 0
        %v414 = vsel %vm326, %v312, 0
        %v416 = vsel %vm326, %v410, 0
        %418 = vmatprep.subr.mxu0 %v416
        %419 = vmatpush1.msra.mxu0 %v414
        %420 = vmatprep.subr.mxu0 0.0
        %421 = vmatpush1.msra.mxu0 0.0
        %422 = vmatprep.subr.mxu0 0.0
        %423 = vmatpush1.msra.mxu0 0.0
        %424 = vmatprep.subr.mxu0 0.0
        %425 = vmatpush1.msra.mxu0 0.0
        %426 = vmatprep.subr.mxu0 0.0
        %427 = vmatpush1.msra.mxu0 0.0
        %428 = vmatprep.subr.mxu0 0.0
        %429 = vmatpush1.msra.mxu0 0.0
        %430 = vmatprep.subr.mxu0 0.0
        %431 = vmatpush1.msra.mxu0 0.0
        %432 = vmatprep.subr.mxu0 0.0
        %433 = vmatpush1.msra.mxu0 0.0
        %434 = vmatprep.subr.mxu0 0.0
        %435 = vmatpush1.msra.mxu0 0.0
        %436 = vmatprep.subr.mxu0 0.0
        %437 = vmatpush1.msra.mxu0 0.0
        %438 = vmatprep.subr.mxu0 0.0
        %439 = vmatpush1.msra.mxu0 0.0
        %440 = vmatprep.subr.mxu0 0.0
        %441 = vmatpush1.msra.mxu0 0.0
        %442 = vmatprep.subr.mxu0 0.0
        %443 = vmatpush1.msra.mxu0 0.0
        %444 = vmatprep.subr.mxu0 0.0
        %445 = vmatpush1.msra.mxu0 0.0
        %446 = vmatprep.subr.mxu0 0.0
        %447 = vmatpush1.msra.mxu0 0.0
        %448 = vmatprep.subr.mxu0 0.0
        %449 = vmatpush1.msra.mxu0 0.0
        %450 = vmatprep.subr.mxu0 0.0
        %451 = vmatpush1.msra.mxu0 0.0
        %452 = vmatprep.subr.mxu0 0.0
        %453 = vmatpush1.msra.mxu0 0.0
        %454 = vmatprep.subr.mxu0 0.0
        %455 = vmatpush1.msra.mxu0 0.0
        %456 = vmatprep.subr.mxu0 0.0
        %457 = vmatpush1.msra.mxu0 0.0
        %458 = vmatprep.subr.mxu0 0.0
        %459 = vmatpush1.msra.mxu0 0.0
        %460 = vmatprep.subr.mxu0 0.0
        %461 = vmatpush1.msra.mxu0 0.0
        %462 = vmatprep.subr.mxu0 0.0
        %463 = vmatpush1.msra.mxu0 0.0
        %464 = vmatprep.subr.mxu0 0.0
        %465 = vmatpush1.msra.mxu0 0.0
        %466 = vmatprep.subr.mxu0 0.0
        %467 = vmatpush1.msra.mxu0 0.0
        %468 = vmatprep.subr.mxu0 0.0
        %469 = vmatpush1.msra.mxu0 0.0
        %470 = vmatprep.subr.mxu0 0.0
        %471 = vmatpush1.msra.mxu0 0.0
        %472 = vmatprep.subr.mxu0 0.0
        %473 = vmatpush1.msra.mxu0 0.0
        %474 = vmatprep.subr.mxu0 0.0
        %475 = vmatpush1.msra.mxu0 0.0
        %476 = vmatprep.subr.mxu0 0.0
        %477 = vmatpush1.msra.mxu0 0.0
        %478 = vmatprep.subr.mxu0 0.0
        %479 = vmatpush1.msra.mxu0 0.0
        %480 = vmatprep.subr.mxu0 0.0
        %481 = vmatpush1.msra.mxu0 0.0
        %482 = vmatprep.mubr.f32.mxu0 0.0
        %483 = vmatmul.mubr.f32.gmra.mrb[0].mxu0 %v412
        %v484 = vpop.f32.mrb[0].mxu0
        %v485 = vadd.f32 %v407, %v484
        %v486 = vpop.f32.mrb[0].mxu0
        %v487 = vadd.f32 %v407, %v486
        %488 = vdwg.mxu0
        %v489 = vrot.slane %v398, 4
        %v490 = vmax.f32 %v398, %v489
        %v491 = vrot.slane %v490, 2
        %v492 = vmax.f32 %v490, %v491
        %v493 = vrot.slane %v492, 1
        %v494 = vmax.f32 %v492, %v493
        %v495 = vrot.slane %v400, 4
        %v496 = vmax.f32 %v400, %v495
        %v497 = vrot.slane %v496, 2
        %v498 = vmax.f32 %v496, %v497
        %v499 = vrot.slane %v498, 1
        %v500 = vmax.f32 %v498, %v499
        %v501 = vrot.slane %v485, 4
        %v502 = vmax.f32 %v485, %v501
        %v503 = vrot.slane %v502, 2
        %v504 = vmax.f32 %v502, %v503
        %v505 = vrot.slane %v504, 1
        %v506 = vmax.f32 %v504, %v505
        %v507 = vrot.slane %v487, 4
        %v508 = vmax.f32 %v487, %v507
        %v509 = vrot.slane %v508, 2
        %v510 = vmax.f32 %v508, %v509
        %v511 = vrot.slane %v510, 1
        %v512 = vmax.f32 %v510, %v511
        %vm513 = vcmask 1041408
        %vm514 = vcmask 1043458
        %vm515 = vmor %vm514, %vm513
        %vm516 = vcmask 832516
        %vm517 = vmor %vm516, %vm515
        %518 = vst.msk [vmem:[#allocation2] sm:$0x3f] %vm517, 0.0
        %v521 = vcombine.low %v494, %v500
        %v523 = vunpack.c.l.s4 1966171168
        %v524 = vunpack.c.0.s8 %v523
        %v525 = vlaneseq
        %v526 = vshrl.u32 %v525, 7
        %v527 = vsub.s32 %v524, %v526
        %v528 = vrot.slane %v521, %v527
        %v530 = vunpack.c.l.s4 1966171168
        %v531 = vunpack.c.0.s8 %v530
        %v532 = vlaneseq
        %v533 = vshrl.u32 %v532, 7
        %v534 = vsub.s32 %v531, %v533
        %v535 = vrot.slane %v528, %v534
        %536 = vrot.lane.b32.xlu0 %v535, 51
        %v537 = vpop.permute.xlu0 %536
        %v538 = vrot.slane %v537, 7
        %vm539 = vcmask 416768
        %v540 = vsel %vm539, %v538, %v537
        %v542 = vlaneseq
        %vm543 = vcmp.ge.s32.totalorder %v542, 51
        %vm544 = vcmp.lt.s32.totalorder %v542, 307
        %vm545 = vmand %vm543, %vm544
        %546 = vst.msk [vmem:[#allocation2] ss:$2 sm:$0x7] %vm545, %v540
        %v549 = vcombine.low %v506, %v512
        %v551 = vunpack.c.l.s4 1966171168
        %v552 = vunpack.c.0.s8 %v551
        %v553 = vlaneseq
        %v554 = vshrl.u32 %v553, 7
        %v555 = vsub.s32 %v552, %v554
        %v556 = vrot.slane %v549, %v555
        %v558 = vunpack.c.l.s4 1966171168
        %v559 = vunpack.c.0.s8 %v558
        %v560 = vlaneseq
        %v561 = vshrl.u32 %v560, 7
        %v562 = vsub.s32 %v559, %v561
        %v563 = vrot.slane %v556, %v562
        %564 = vrot.lane.b32.xlu0 %v563, 51
        %v565 = vpop.permute.xlu0 %564
        %v566 = vrot.slane %v565, 7
        %v567 = vsel %vm539, %v566, %v565
        %s569 = scalar_lea.vmem [#allocation2], 1
        %570 = vst.msk [vmem:[%s569] ss:$2 sm:$0x7] %vm545, %v567
        %v571 = vlaneseq
        %v572 = vand.u32 %v571, 127
        %v573 = vadd.s32 %v572, 128
        %vm574 = vcmp.lt.s32.totalorder %v572, 0
        %v575 = vsub.s32 0, %v572
        %v576 = vsel %vm574, %v575, %v572
        %v577 = vshrl.u32 %v576, 4
        %v578 = vand.u32 %v576, 15
        %v579 = vsub.s32 0, %v578
        %v580 = vsel %vm574, %v579, %v578
        %vm581 = vcmp.lt.s32.totalorder %v573, 0
        %v582 = vsub.s32 0, %v573
        %v583 = vsel %vm581, %v582, %v573
        %v584 = vshrl.u32 %v583, 4
        %v585 = vand.u32 %v583, 15
        %v586 = vsub.s32 0, %v585
        %v587 = vsel %vm581, %v586, %v585
        %vm588 = vcmp.ne.s32.totalorder %v580, 0
        %vm589 = vcmp.ne.s32.totalorder %v587, 0
        %vm590 = vcmp.lt.s32.totalorder %v580, 0
        %vm591 = vcmp.lt.s32.totalorder %v587, 0
        %vm592 = vmand %vm590, %vm588
        %vm593 = vmand %vm591, %vm589
        %v594 = vadd.s32 %v580, 16
        %v595 = vadd.s32 %v587, 16
        %v596 = vsel %vm592, %v594, %v580
        %v597 = vsel %vm593, %v595, %v587
        %v598 = vld [vmem:[#allocation2] ss:$2 sm:$0x3]
        %v599 = vld [vmem:[%s569] ss:$2 sm:$0x3]
        %s600 = sld [smem:[#allocation3]]
        %v601 = vstv %s600
        %v602 = vmul.f32 %v601, %v598
        %v603 = vadd.f32 %v602, 0.0
        %s604 = sld [smem:[#allocation3 + $0x31]]
        %v605 = vstv %s604
        %v606 = vmul.f32 %v605, %v599
        %v607 = vadd.f32 %v603, %v606
        %v608 = vld [vmem:[#allocation2] ss:$2 sm:$0x7]
        %v609 = vld [vmem:[%s569] ss:$2 sm:$0x7]
        %s610 = sld [smem:[#allocation3 + $0x7]]
        %v611 = vstv %s610
        %v612 = vmul.f32 %v611, %v608
        %614 = vrot.lane.b32.xlu0 %v612, 112
        %v615 = vpop.permute.xlu0 %614
        %v616 = vrot.slane %v615, 1
        %vm617 = vcmask 916480
        %v618 = vsel %vm617, %v615, %v616
        %v620 = vadd.f32 %v607, %v618
        %s621 = sld [smem:[#allocation3 + $0x38]]
        %v622 = vstv %s621
        %v623 = vmul.f32 %v622, %v609
        %625 = vrot.lane.b32.xlu0 %v623, 112
        %v626 = vpop.permute.xlu0 %625
        %v627 = vrot.slane %v626, 1
        %v628 = vsel %vm617, %v626, %v627
        %v630 = vadd.f32 %v620, %v628
        %s631 = sld [smem:[#allocation3 + $0xe]]
        %v632 = vstv %s631
        %v633 = vmul.f32 %v632, %v608
        %635 = vrot.lane.b32.xlu0 %v633, 96
        %v636 = vpop.permute.xlu0 %635
        %v637 = vrot.slane %v636, 1
        %vm638 = vcmask 785408
        %v639 = vsel %vm638, %v636, %v637
        %v641 = vadd.f32 %v630, %v639
        %s642 = sld [smem:[#allocation3 + $0x3f]]
        %v643 = vstv %s642
        %v644 = vmul.f32 %v643, %v609
        %646 = vrot.lane.b32.xlu0 %v644, 96
        %v647 = vpop.permute.xlu0 %646
        %v648 = vrot.slane %v647, 1
        %v649 = vsel %vm638, %v647, %v648
        %v651 = vadd.f32 %v641, %v649
        %s652 = sld [smem:[#allocation3 + $0x15]]
        %v653 = vstv %s652
        %v654 = vmul.f32 %v653, %v608
        %656 = vrot.lane.b32.xlu0 %v654, 80
        %v657 = vpop.permute.xlu0 %656
        %v658 = vrot.slane %v657, 1
        %vm659 = vcmask 654336
        %v660 = vsel %vm659, %v657, %v658
        %v662 = vadd.f32 %v651, %v660
        %s663 = sld [smem:[#allocation3 + $0x46]]
        %v664 = vstv %s663
        %v665 = vmul.f32 %v664, %v609
        %667 = vrot.lane.b32.xlu0 %v665, 80
        %v668 = vpop.permute.xlu0 %667
        %v669 = vrot.slane %v668, 1
        %v670 = vsel %vm659, %v668, %v669
        %v672 = vadd.f32 %v662, %v670
        %s673 = sld [smem:[#allocation3 + $0x1c]]
        %v674 = vstv %s673
        %v675 = vmul.f32 %v674, %v608
        %677 = vrot.lane.b32.xlu0 %v675, 64
        %v678 = vpop.permute.xlu0 %677
        %v679 = vrot.slane %v678, 1
        %vm680 = vcmask 523264
        %v681 = vsel %vm680, %v678, %v679
        %v683 = vadd.f32 %v672, %v681
        %s684 = sld [smem:[#allocation3 + $0x4d]]
        %v685 = vstv %s684
        %v686 = vmul.f32 %v685, %v609
        %688 = vrot.lane.b32.xlu0 %v686, 64
        %v689 = vpop.permute.xlu0 %688
        %v690 = vrot.slane %v689, 1
        %v691 = vsel %vm680, %v689, %v690
        %v693 = vadd.f32 %v683, %v691
        %s694 = sld [smem:[#allocation3 + $0x23]]
        %v695 = vstv %s694
        %v696 = vmul.f32 %v695, %v608
        %698 = vrot.lane.b32.xlu0 %v696, 48
        %v699 = vpop.permute.xlu0 %698
        %v700 = vrot.slane %v699, 1
        %vm701 = vcmask 392192
        %v702 = vsel %vm701, %v699, %v700
        %v704 = vadd.f32 %v693, %v702
        %s705 = sld [smem:[#allocation3 + $0x54]]
        %v706 = vstv %s705
        %v707 = vmul.f32 %v706, %v609
        %709 = vrot.lane.b32.xlu0 %v707, 48
        %v710 = vpop.permute.xlu0 %709
        %v711 = vrot.slane %v710, 1
        %v712 = vsel %vm701, %v710, %v711
        %v714 = vadd.f32 %v704, %v712
        %s715 = sld [smem:[#allocation3 + $0x2a]]
        %v716 = vstv %s715
        %v717 = vmul.f32 %v716, %v608
        %719 = vrot.lane.b32.xlu0 %v717, 32
        %v720 = vpop.permute.xlu0 %719
        %v721 = vrot.slane %v720, 1
        %vm722 = vcmask 261120
        %v723 = vsel %vm722, %v720, %v721
        %v725 = vadd.f32 %v714, %v723
        %s726 = sld [smem:[#allocation3 + $0x5b]]
        %v727 = vstv %s726
        %v728 = vmul.f32 %v727, %v609
        %730 = vrot.lane.b32.xlu0 %v728, 32
        %v731 = vpop.permute.xlu0 %730
        %v732 = vrot.slane %v731, 1
        %v733 = vsel %vm722, %v731, %v732
        %v735 = vadd.f32 %v725, %v733
        %v736 = vadd.s32 %v596, 4294967293
        %v737 = vadd.s32 %v597, 4294967293
        %vm738 = vcmp.ge.s32.totalorder %v736, 0
        %vm739 = vcmp.ge.s32.totalorder %v737, 0
        %vm740 = vcmp.lt.s32.totalorder %v736, 16
        %vm741 = vcmp.lt.s32.totalorder %v737, 16
        %vm742 = vmand %vm738, %vm740
        %vm743 = vmand %vm739, %vm741
        %v744 = vsel %vm742, 1, 0
        %v745 = vsel %vm743, 1, 0
        %v746 = vcvt.s32.f32 %v744
        %v747 = vcvt.s32.f32 %v745
        %v750 = vcombine.low %v746, %v747
        %v752 = vunpack.c.l.s4 1966171168
        %v753 = vunpack.c.0.s8 %v752
        %v754 = vlaneseq
        %v755 = vshrl.u32 %v754, 7
        %v756 = vsub.s32 %v753, %v755
        %v757 = vrot.slane %v750, %v756
        %v759 = vunpack.c.l.s4 1966171168
        %v760 = vunpack.c.0.s8 %v759
        %v761 = vlaneseq
        %v762 = vshrl.u32 %v761, 7
        %v763 = vsub.s32 %v760, %v762
        %v764 = vrot.slane %v757, %v763
        %v766 = vmul.f32 %v735, %v764
        %v767 = vadd.f32 %v766, 0.0
        %v768 = vld [vmem:[#allocation2] ss:$2 sm:$0x7]
        %v769 = vld [vmem:[%s569] ss:$2 sm:$0x7]
        %s770 = sld [smem:[#allocation3 + $0x1]]
        %v771 = vstv %s770
        %v772 = vmul.f32 %v771, %v768
        %v773 = vadd.f32 %v772, 0.0
        %s774 = sld [smem:[#allocation3 + $0x32]]
        %v775 = vstv %s774
        %v776 = vmul.f32 %v775, %v769
        %v777 = vadd.f32 %v773, %v776
        %s778 = sld [smem:[#allocation3 + $0x8]]
        %v779 = vstv %s778
        %v780 = vmul.f32 %v779, %v768
        %782 = vrot.lane.b32.xlu0 %v780, 112
        %v783 = vpop.permute.xlu0 %782
        %v784 = vrot.slane %v783, 1
        %v785 = vsel %vm617, %v783, %v784
        %v787 = vadd.f32 %v777, %v785
        %s788 = sld [smem:[#allocation3 + $0x39]]
        %v789 = vstv %s788
        %v790 = vmul.f32 %v789, %v769
        %792 = vrot.lane.b32.xlu0 %v790, 112
        %v793 = vpop.permute.xlu0 %792
        %v794 = vrot.slane %v793, 1
        %v795 = vsel %vm617, %v793, %v794
        %v797 = vadd.f32 %v787, %v795
        %s798 = sld [smem:[#allocation3 + $0xf]]
        %v799 = vstv %s798
        %v800 = vmul.f32 %v799, %v768
        %802 = vrot.lane.b32.xlu0 %v800, 96
        %v803 = vpop.permute.xlu0 %802
        %v804 = vrot.slane %v803, 1
        %v805 = vsel %vm638, %v803, %v804
        %v807 = vadd.f32 %v797, %v805
        %s808 = sld [smem:[#allocation3 + $0x40]]
        %v809 = vstv %s808
        %v810 = vmul.f32 %v809, %v769
        %812 = vrot.lane.b32.xlu0 %v810, 96
        %v813 = vpop.permute.xlu0 %812
        %v814 = vrot.slane %v813, 1
        %v815 = vsel %vm638, %v813, %v814
        %v817 = vadd.f32 %v807, %v815
        %s818 = sld [smem:[#allocation3 + $0x16]]
        %v819 = vstv %s818
        %v820 = vmul.f32 %v819, %v768
        %822 = vrot.lane.b32.xlu0 %v820, 80
        %v823 = vpop.permute.xlu0 %822
        %v824 = vrot.slane %v823, 1
        %v825 = vsel %vm659, %v823, %v824
        %v827 = vadd.f32 %v817, %v825
        %s828 = sld [smem:[#allocation3 + $0x47]]
        %v829 = vstv %s828
        %v830 = vmul.f32 %v829, %v769
        %832 = vrot.lane.b32.xlu0 %v830, 80
        %v833 = vpop.permute.xlu0 %832
        %v834 = vrot.slane %v833, 1
        %v835 = vsel %vm659, %v833, %v834
        %v837 = vadd.f32 %v827, %v835
        %s838 = sld [smem:[#allocation3 + $0x1d]]
        %v839 = vstv %s838
        %v840 = vmul.f32 %v839, %v768
        %842 = vrot.lane.b32.xlu0 %v840, 64
        %v843 = vpop.permute.xlu0 %842
        %v844 = vrot.slane %v843, 1
        %v845 = vsel %vm680, %v843, %v844
        %v847 = vadd.f32 %v837, %v845
        %s848 = sld [smem:[#allocation3 + $0x4e]]
        %v849 = vstv %s848
        %v850 = vmul.f32 %v849, %v769
        %852 = vrot.lane.b32.xlu0 %v850, 64
        %v853 = vpop.permute.xlu0 %852
        %v854 = vrot.slane %v853, 1
        %v855 = vsel %vm680, %v853, %v854
        %v857 = vadd.f32 %v847, %v855
        %s858 = sld [smem:[#allocation3 + $0x24]]
        %v859 = vstv %s858
        %v860 = vmul.f32 %v859, %v768
        %862 = vrot.lane.b32.xlu0 %v860, 48
        %v863 = vpop.permute.xlu0 %862
        %v864 = vrot.slane %v863, 1
        %v865 = vsel %vm701, %v863, %v864
        %v867 = vadd.f32 %v857, %v865
        %s868 = sld [smem:[#allocation3 + $0x55]]
        %v869 = vstv %s868
        %v870 = vmul.f32 %v869, %v769
        %872 = vrot.lane.b32.xlu0 %v870, 48
        %v873 = vpop.permute.xlu0 %872
        %v874 = vrot.slane %v873, 1
        %v875 = vsel %vm701, %v873, %v874
        %v877 = vadd.f32 %v867, %v875
        %s878 = sld [smem:[#allocation3 + $0x2b]]
        %v879 = vstv %s878
        %v880 = vmul.f32 %v879, %v768
        %882 = vrot.lane.b32.xlu0 %v880, 32
        %v883 = vpop.permute.xlu0 %882
        %v884 = vrot.slane %v883, 1
        %v885 = vsel %vm722, %v883, %v884
        %v887 = vadd.f32 %v877, %v885
        %s888 = sld [smem:[#allocation3 + $0x5c]]
        %v889 = vstv %s888
        %v890 = vmul.f32 %v889, %v769
        %892 = vrot.lane.b32.xlu0 %v890, 32
        %v893 = vpop.permute.xlu0 %892
        %v894 = vrot.slane %v893, 1
        %v895 = vsel %vm722, %v893, %v894
        %v897 = vadd.f32 %v887, %v895
        %v898 = vadd.s32 %v596, 4294967294
        %v899 = vadd.s32 %v597, 4294967294
        %vm900 = vcmp.ge.s32.totalorder %v898, 0
        %vm901 = vcmp.ge.s32.totalorder %v899, 0
        %vm902 = vcmp.lt.s32.totalorder %v898, 16
        %vm903 = vcmp.lt.s32.totalorder %v899, 16
        %vm904 = vmand %vm900, %vm902
        %vm905 = vmand %vm901, %vm903
        %v906 = vsel %vm904, 1, 0
        %v907 = vsel %vm905, 1, 0
        %v908 = vcvt.s32.f32 %v906
        %v909 = vcvt.s32.f32 %v907
        %v912 = vcombine.low %v908, %v909
        %v914 = vunpack.c.l.s4 1966171168
        %v915 = vunpack.c.0.s8 %v914
        %v916 = vlaneseq
        %v917 = vshrl.u32 %v916, 7
        %v918 = vsub.s32 %v915, %v917
        %v919 = vrot.slane %v912, %v918
        %v921 = vunpack.c.l.s4 1966171168
        %v922 = vunpack.c.0.s8 %v921
        %v923 = vlaneseq
        %v924 = vshrl.u32 %v923, 7
        %v925 = vsub.s32 %v922, %v924
        %v926 = vrot.slane %v919, %v925
        %927 = vrot.lane.b32.xlu0 %v926, 1
        %v928 = vpop.permute.xlu0 %927
        %v929 = vrot.slane %v928, 7
        %vm930 = vcmask 7168
        %v931 = vsel %vm930, %v929, %v928
        %v933 = vmul.f32 %v897, %v931
        %935 = vrot.lane.b32.xlu0 %v933, 127
        %v936 = vpop.permute.xlu0 %935
        %v937 = vrot.slane %v936, 1
        %vm938 = vcmask 1039360
        %v939 = vsel %vm938, %v936, %v937
        %v941 = vadd.f32 %v767, %v939
        %v942 = vld [vmem:[#allocation2] ss:$2 sm:$0x7]
        %v943 = vld [vmem:[%s569] ss:$2 sm:$0x7]
        %s944 = sld [smem:[#allocation3 + $0x2]]
        %v945 = vstv %s944
        %v946 = vmul.f32 %v945, %v942
        %v947 = vadd.f32 %v946, 0.0
        %s948 = sld [smem:[#allocation3 + $0x33]]
        %v949 = vstv %s948
        %v950 = vmul.f32 %v949, %v943
        %v951 = vadd.f32 %v947, %v950
        %s952 = sld [smem:[#allocation3 + $0x9]]
        %v953 = vstv %s952
        %v954 = vmul.f32 %v953, %v942
        %956 = vrot.lane.b32.xlu0 %v954, 112
        %v957 = vpop.permute.xlu0 %956
        %v958 = vrot.slane %v957, 1
        %v959 = vsel %vm617, %v957, %v958
        %v961 = vadd.f32 %v951, %v959
        %s962 = sld [smem:[#allocation3 + $0x3a]]
        %v963 = vstv %s962
        %v964 = vmul.f32 %v963, %v943
        %966 = vrot.lane.b32.xlu0 %v964, 112
        %v967 = vpop.permute.xlu0 %966
        %v968 = vrot.slane %v967, 1
        %v969 = vsel %vm617, %v967, %v968
        %v971 = vadd.f32 %v961, %v969
        %s972 = sld [smem:[#allocation3 + $0x10]]
        %v973 = vstv %s972
        %v974 = vmul.f32 %v973, %v942
        %976 = vrot.lane.b32.xlu0 %v974, 96
        %v977 = vpop.permute.xlu0 %976
        %v978 = vrot.slane %v977, 1
        %v979 = vsel %vm638, %v977, %v978
        %v981 = vadd.f32 %v971, %v979
        %s982 = sld [smem:[#allocation3 + $0x41]]
        %v983 = vstv %s982
        %v984 = vmul.f32 %v983, %v943
        %986 = vrot.lane.b32.xlu0 %v984, 96
        %v987 = vpop.permute.xlu0 %986
        %v988 = vrot.slane %v987, 1
        %v989 = vsel %vm638, %v987, %v988
        %v991 = vadd.f32 %v981, %v989
        %s992 = sld [smem:[#allocation3 + $0x17]]
        %v993 = vstv %s992
        %v994 = vmul.f32 %v993, %v942
        %996 = vrot.lane.b32.xlu0 %v994, 80
        %v997 = vpop.permute.xlu0 %996
        %v998 = vrot.slane %v997, 1
        %v999 = vsel %vm659, %v997, %v998
        %v1001 = vadd.f32 %v991, %v999
        %s1002 = sld [smem:[#allocation3 + $0x48]]
        %v1003 = vstv %s1002
        %v1004 = vmul.f32 %v1003, %v943
        %1006 = vrot.lane.b32.xlu0 %v1004, 80
        %v1007 = vpop.permute.xlu0 %1006
        %v1008 = vrot.slane %v1007, 1
        %v1009 = vsel %vm659, %v1007, %v1008
        %v1011 = vadd.f32 %v1001, %v1009
        %s1012 = sld [smem:[#allocation3 + $0x1e]]
        %v1013 = vstv %s1012
        %v1014 = vmul.f32 %v1013, %v942
        %1016 = vrot.lane.b32.xlu0 %v1014, 64
        %v1017 = vpop.permute.xlu0 %1016
        %v1018 = vrot.slane %v1017, 1
        %v1019 = vsel %vm680, %v1017, %v1018
        %v1021 = vadd.f32 %v1011, %v1019
        %s1022 = sld [smem:[#allocation3 + $0x4f]]
        %v1023 = vstv %s1022
        %v1024 = vmul.f32 %v1023, %v943
        %1026 = vrot.lane.b32.xlu0 %v1024, 64
        %v1027 = vpop.permute.xlu0 %1026
        %v1028 = vrot.slane %v1027, 1
        %v1029 = vsel %vm680, %v1027, %v1028
        %v1031 = vadd.f32 %v1021, %v1029
        %s1032 = sld [smem:[#allocation3 + $0x25]]
        %v1033 = vstv %s1032
        %v1034 = vmul.f32 %v1033, %v942
        %1036 = vrot.lane.b32.xlu0 %v1034, 48
        %v1037 = vpop.permute.xlu0 %1036
        %v1038 = vrot.slane %v1037, 1
        %v1039 = vsel %vm701, %v1037, %v1038
        %v1041 = vadd.f32 %v1031, %v1039
        %s1042 = sld [smem:[#allocation3 + $0x56]]
        %v1043 = vstv %s1042
        %v1044 = vmul.f32 %v1043, %v943
        %1046 = vrot.lane.b32.xlu0 %v1044, 48
        %v1047 = vpop.permute.xlu0 %1046
        %v1048 = vrot.slane %v1047, 1
        %v1049 = vsel %vm701, %v1047, %v1048
        %v1051 = vadd.f32 %v1041, %v1049
        %s1052 = sld [smem:[#allocation3 + $0x2c]]
        %v1053 = vstv %s1052
        %v1054 = vmul.f32 %v1053, %v942
        %1056 = vrot.lane.b32.xlu0 %v1054, 32
        %v1057 = vpop.permute.xlu0 %1056
        %v1058 = vrot.slane %v1057, 1
        %v1059 = vsel %vm722, %v1057, %v1058
        %v1061 = vadd.f32 %v1051, %v1059
        %s1062 = sld [smem:[#allocation3 + $0x5d]]
        %v1063 = vstv %s1062
        %v1064 = vmul.f32 %v1063, %v943
        %1066 = vrot.lane.b32.xlu0 %v1064, 32
        %v1067 = vpop.permute.xlu0 %1066
        %v1068 = vrot.slane %v1067, 1
        %v1069 = vsel %vm722, %v1067, %v1068
        %v1071 = vadd.f32 %v1061, %v1069
        %v1072 = vadd.s32 %v596, 4294967295
        %v1073 = vadd.s32 %v597, 4294967295
        %vm1074 = vcmp.ge.s32.totalorder %v1072, 0
        %vm1075 = vcmp.ge.s32.totalorder %v1073, 0
        %vm1076 = vcmp.lt.s32.totalorder %v1072, 16
        %vm1077 = vcmp.lt.s32.totalorder %v1073, 16
        %vm1078 = vmand %vm1074, %vm1076
        %vm1079 = vmand %vm1075, %vm1077
        %v1080 = vsel %vm1078, 1, 0
        %v1081 = vsel %vm1079, 1, 0
        %v1082 = vcvt.s32.f32 %v1080
        %v1083 = vcvt.s32.f32 %v1081
        %v1086 = vcombine.low %v1082, %v1083
        %v1088 = vunpack.c.l.s4 1966171168
        %v1089 = vunpack.c.0.s8 %v1088
        %v1090 = vlaneseq
        %v1091 = vshrl.u32 %v1090, 7
        %v1092 = vsub.s32 %v1089, %v1091
        %v1093 = vrot.slane %v1086, %v1092
        %v1095 = vunpack.c.l.s4 1966171168
        %v1096 = vunpack.c.0.s8 %v1095
        %v1097 = vlaneseq
        %v1098 = vshrl.u32 %v1097, 7
        %v1099 = vsub.s32 %v1096, %v1098
        %v1100 = vrot.slane %v1093, %v1099
        %1101 = vrot.lane.b32.xlu0 %v1100, 2
        %v1102 = vpop.permute.xlu0 %1101
        %v1103 = vrot.slane %v1102, 7
        %vm1104 = vcmask 15360
        %v1105 = vsel %vm1104, %v1103, %v1102
        %v1107 = vmul.f32 %v1071, %v1105
        %1109 = vrot.lane.b32.xlu0 %v1107, 126
        %v1110 = vpop.permute.xlu0 %1109
        %v1111 = vrot.slane %v1110, 1
        %vm1112 = vcmask 1031168
        %v1113 = vsel %vm1112, %v1110, %v1111
        %v1115 = vadd.f32 %v941, %v1113
        %v1116 = vld [vmem:[#allocation2] ss:$2 sm:$0x7]
        %v1117 = vld [vmem:[%s569] ss:$2 sm:$0x7]
        %s1118 = sld [smem:[#allocation3 + $0x3]]
        %v1119 = vstv %s1118
        %v1120 = vmul.f32 %v1119, %v1116
        %v1121 = vadd.f32 %v1120, 0.0
        %s1122 = sld [smem:[#allocation3 + $0x34]]
        %v1123 = vstv %s1122
        %v1124 = vmul.f32 %v1123, %v1117
        %v1125 = vadd.f32 %v1121, %v1124
        %s1126 = sld [smem:[#allocation3 + $0xa]]
        %v1127 = vstv %s1126
        %v1128 = vmul.f32 %v1127, %v1116
        %1130 = vrot.lane.b32.xlu0 %v1128, 112
        %v1131 = vpop.permute.xlu0 %1130
        %v1132 = vrot.slane %v1131, 1
        %v1133 = vsel %vm617, %v1131, %v1132
        %v1135 = vadd.f32 %v1125, %v1133
        %s1136 = sld [smem:[#allocation3 + $0x3b]]
        %v1137 = vstv %s1136
        %v1138 = vmul.f32 %v1137, %v1117
        %1140 = vrot.lane.b32.xlu0 %v1138, 112
        %v1141 = vpop.permute.xlu0 %1140
        %v1142 = vrot.slane %v1141, 1
        %v1143 = vsel %vm617, %v1141, %v1142
        %v1145 = vadd.f32 %v1135, %v1143
        %s1146 = sld [smem:[#allocation3 + $0x11]]
        %v1147 = vstv %s1146
        %v1148 = vmul.f32 %v1147, %v1116
        %1150 = vrot.lane.b32.xlu0 %v1148, 96
        %v1151 = vpop.permute.xlu0 %1150
        %v1152 = vrot.slane %v1151, 1
        %v1153 = vsel %vm638, %v1151, %v1152
        %v1155 = vadd.f32 %v1145, %v1153
        %s1156 = sld [smem:[#allocation3 + $0x42]]
        %v1157 = vstv %s1156
        %v1158 = vmul.f32 %v1157, %v1117
        %1160 = vrot.lane.b32.xlu0 %v1158, 96
        %v1161 = vpop.permute.xlu0 %1160
        %v1162 = vrot.slane %v1161, 1
        %v1163 = vsel %vm638, %v1161, %v1162
        %v1165 = vadd.f32 %v1155, %v1163
        %s1166 = sld [smem:[#allocation3 + $0x18]]
        %v1167 = vstv %s1166
        %v1168 = vmul.f32 %v1167, %v1116
        %1170 = vrot.lane.b32.xlu0 %v1168, 80
        %v1171 = vpop.permute.xlu0 %1170
        %v1172 = vrot.slane %v1171, 1
        %v1173 = vsel %vm659, %v1171, %v1172
        %v1175 = vadd.f32 %v1165, %v1173
        %s1176 = sld [smem:[#allocation3 + $0x49]]
        %v1177 = vstv %s1176
        %v1178 = vmul.f32 %v1177, %v1117
        %1180 = vrot.lane.b32.xlu0 %v1178, 80
        %v1181 = vpop.permute.xlu0 %1180
        %v1182 = vrot.slane %v1181, 1
        %v1183 = vsel %vm659, %v1181, %v1182
        %v1185 = vadd.f32 %v1175, %v1183
        %s1186 = sld [smem:[#allocation3 + $0x1f]]
        %v1187 = vstv %s1186
        %v1188 = vmul.f32 %v1187, %v1116
        %1190 = vrot.lane.b32.xlu0 %v1188, 64
        %v1191 = vpop.permute.xlu0 %1190
        %v1192 = vrot.slane %v1191, 1
        %v1193 = vsel %vm680, %v1191, %v1192
        %v1195 = vadd.f32 %v1185, %v1193
        %s1196 = sld [smem:[#allocation3 + $0x50]]
        %v1197 = vstv %s1196
        %v1198 = vmul.f32 %v1197, %v1117
        %1200 = vrot.lane.b32.xlu0 %v1198, 64
        %v1201 = vpop.permute.xlu0 %1200
        %v1202 = vrot.slane %v1201, 1
        %v1203 = vsel %vm680, %v1201, %v1202
        %v1205 = vadd.f32 %v1195, %v1203
        %s1206 = sld [smem:[#allocation3 + $0x26]]
        %v1207 = vstv %s1206
        %v1208 = vmul.f32 %v1207, %v1116
        %1210 = vrot.lane.b32.xlu0 %v1208, 48
        %v1211 = vpop.permute.xlu0 %1210
        %v1212 = vrot.slane %v1211, 1
        %v1213 = vsel %vm701, %v1211, %v1212
        %v1215 = vadd.f32 %v1205, %v1213
        %s1216 = sld [smem:[#allocation3 + $0x57]]
        %v1217 = vstv %s1216
        %v1218 = vmul.f32 %v1217, %v1117
        %1220 = vrot.lane.b32.xlu0 %v1218, 48
        %v1221 = vpop.permute.xlu0 %1220
        %v1222 = vrot.slane %v1221, 1
        %v1223 = vsel %vm701, %v1221, %v1222
        %v1225 = vadd.f32 %v1215, %v1223
        %s1226 = sld [smem:[#allocation3 + $0x2d]]
        %v1227 = vstv %s1226
        %v1228 = vmul.f32 %v1227, %v1116
        %1230 = vrot.lane.b32.xlu0 %v1228, 32
        %v1231 = vpop.permute.xlu0 %1230
        %v1232 = vrot.slane %v1231, 1
        %v1233 = vsel %vm722, %v1231, %v1232
        %v1235 = vadd.f32 %v1225, %v1233
        %s1236 = sld [smem:[#allocation3 + $0x5e]]
        %v1237 = vstv %s1236
        %v1238 = vmul.f32 %v1237, %v1117
        %1240 = vrot.lane.b32.xlu0 %v1238, 32
        %v1241 = vpop.permute.xlu0 %1240
        %v1242 = vrot.slane %v1241, 1
        %v1243 = vsel %vm722, %v1241, %v1242
        %v1245 = vadd.f32 %v1235, %v1243
        %1247 = vrot.lane.b32.xlu0 %v1245, 125
        %v1248 = vpop.permute.xlu0 %1247
        %v1249 = vrot.slane %v1248, 1
        %vm1250 = vcmask 1022976
        %v1251 = vsel %vm1250, %v1248, %v1249
        %v1253 = vadd.f32 %v1115, %v1251
        %s1254 = sld [smem:[#allocation3 + $0x4]]
        %v1255 = vstv %s1254
        %v1256 = vmul.f32 %v1255, %v1116
        %v1257 = vadd.f32 %v1256, 0.0
        %s1258 = sld [smem:[#allocation3 + $0x35]]
        %v1259 = vstv %s1258
        %v1260 = vmul.f32 %v1259, %v1117
        %v1261 = vadd.f32 %v1257, %v1260
        %s1262 = sld [smem:[#allocation3 + $0xb]]
        %v1263 = vstv %s1262
        %v1264 = vmul.f32 %v1263, %v1116
        %1266 = vrot.lane.b32.xlu0 %v1264, 112
        %v1267 = vpop.permute.xlu0 %1266
        %v1268 = vrot.slane %v1267, 1
        %v1269 = vsel %vm617, %v1267, %v1268
        %v1271 = vadd.f32 %v1261, %v1269
        %s1272 = sld [smem:[#allocation3 + $0x3c]]
        %v1273 = vstv %s1272
        %v1274 = vmul.f32 %v1273, %v1117
        %1276 = vrot.lane.b32.xlu0 %v1274, 112
        %v1277 = vpop.permute.xlu0 %1276
        %v1278 = vrot.slane %v1277, 1
        %v1279 = vsel %vm617, %v1277, %v1278
        %v1281 = vadd.f32 %v1271, %v1279
        %s1282 = sld [smem:[#allocation3 + $0x12]]
        %v1283 = vstv %s1282
        %v1284 = vmul.f32 %v1283, %v1116
        %1286 = vrot.lane.b32.xlu0 %v1284, 96
        %v1287 = vpop.permute.xlu0 %1286
        %v1288 = vrot.slane %v1287, 1
        %v1289 = vsel %vm638, %v1287, %v1288
        %v1291 = vadd.f32 %v1281, %v1289
        %s1292 = sld [smem:[#allocation3 + $0x43]]
        %v1293 = vstv %s1292
        %v1294 = vmul.f32 %v1293, %v1117
        %1296 = vrot.lane.b32.xlu0 %v1294, 96
        %v1297 = vpop.permute.xlu0 %1296
        %v1298 = vrot.slane %v1297, 1
        %v1299 = vsel %vm638, %v1297, %v1298
        %v1301 = vadd.f32 %v1291, %v1299
        %s1302 = sld [smem:[#allocation3 + $0x19]]
        %v1303 = vstv %s1302
        %v1304 = vmul.f32 %v1303, %v1116
        %1306 = vrot.lane.b32.xlu0 %v1304, 80
        %v1307 = vpop.permute.xlu0 %1306
        %v1308 = vrot.slane %v1307, 1
        %v1309 = vsel %vm659, %v1307, %v1308
        %v1311 = vadd.f32 %v1301, %v1309
        %s1312 = sld [smem:[#allocation3 + $0x4a]]
        %v1313 = vstv %s1312
        %v1314 = vmul.f32 %v1313, %v1117
        %1316 = vrot.lane.b32.xlu0 %v1314, 80
        %v1317 = vpop.permute.xlu0 %1316
        %v1318 = vrot.slane %v1317, 1
        %v1319 = vsel %vm659, %v1317, %v1318
        %v1321 = vadd.f32 %v1311, %v1319
        %s1322 = sld [smem:[#allocation3 + $0x20]]
        %v1323 = vstv %s1322
        %v1324 = vmul.f32 %v1323, %v1116
        %1326 = vrot.lane.b32.xlu0 %v1324, 64
        %v1327 = vpop.permute.xlu0 %1326
        %v1328 = vrot.slane %v1327, 1
        %v1329 = vsel %vm680, %v1327, %v1328
        %v1331 = vadd.f32 %v1321, %v1329
        %s1332 = sld [smem:[#allocation3 + $0x51]]
        %v1333 = vstv %s1332
        %v1334 = vmul.f32 %v1333, %v1117
        %1336 = vrot.lane.b32.xlu0 %v1334, 64
        %v1337 = vpop.permute.xlu0 %1336
        %v1338 = vrot.slane %v1337, 1
        %v1339 = vsel %vm680, %v1337, %v1338
        %v1341 = vadd.f32 %v1331, %v1339
        %s1342 = sld [smem:[#allocation3 + $0x27]]
        %v1343 = vstv %s1342
        %v1344 = vmul.f32 %v1343, %v1116
        %1346 = vrot.lane.b32.xlu0 %v1344, 48
        %v1347 = vpop.permute.xlu0 %1346
        %v1348 = vrot.slane %v1347, 1
        %v1349 = vsel %vm701, %v1347, %v1348
        %v1351 = vadd.f32 %v1341, %v1349
        %s1352 = sld [smem:[#allocation3 + $0x58]]
        %v1353 = vstv %s1352
        %v1354 = vmul.f32 %v1353, %v1117
        %1356 = vrot.lane.b32.xlu0 %v1354, 48
        %v1357 = vpop.permute.xlu0 %1356
        %v1358 = vrot.slane %v1357, 1
        %v1359 = vsel %vm701, %v1357, %v1358
        %v1361 = vadd.f32 %v1351, %v1359
        %s1362 = sld [smem:[#allocation3 + $0x2e]]
        %v1363 = vstv %s1362
        %v1364 = vmul.f32 %v1363, %v1116
        %1366 = vrot.lane.b32.xlu0 %v1364, 32
        %v1367 = vpop.permute.xlu0 %1366
        %v1368 = vrot.slane %v1367, 1
        %v1369 = vsel %vm722, %v1367, %v1368
        %v1371 = vadd.f32 %v1361, %v1369
        %s1372 = sld [smem:[#allocation3 + $0x5f]]
        %v1373 = vstv %s1372
        %v1374 = vmul.f32 %v1373, %v1117
        %1376 = vrot.lane.b32.xlu0 %v1374, 32
        %v1377 = vpop.permute.xlu0 %1376
        %v1378 = vrot.slane %v1377, 1
        %v1379 = vsel %vm722, %v1377, %v1378
        %v1381 = vadd.f32 %v1371, %v1379
        %v1382 = vadd.s32 %v596, 1
        %v1383 = vadd.s32 %v597, 1
        %vm1384 = vcmp.ge.s32.totalorder %v1382, 0
        %vm1385 = vcmp.ge.s32.totalorder %v1383, 0
        %vm1386 = vcmp.lt.s32.totalorder %v1382, 16
        %vm1387 = vcmp.lt.s32.totalorder %v1383, 16
        %vm1388 = vmand %vm1384, %vm1386
        %vm1389 = vmand %vm1385, %vm1387
        %v1390 = vsel %vm1388, 1, 0
        %v1391 = vsel %vm1389, 1, 0
        %v1392 = vcvt.s32.f32 %v1390
        %v1393 = vcvt.s32.f32 %v1391
        %v1396 = vcombine.low %v1392, %v1393
        %v1398 = vunpack.c.l.s4 1966171168
        %v1399 = vunpack.c.0.s8 %v1398
        %v1400 = vlaneseq
        %v1401 = vshrl.u32 %v1400, 7
        %v1402 = vsub.s32 %v1399, %v1401
        %v1403 = vrot.slane %v1396, %v1402
        %v1405 = vunpack.c.l.s4 1966171168
        %v1406 = vunpack.c.0.s8 %v1405
        %v1407 = vlaneseq
        %v1408 = vshrl.u32 %v1407, 7
        %v1409 = vsub.s32 %v1406, %v1408
        %v1410 = vrot.slane %v1403, %v1409
        %1411 = vrot.lane.b32.xlu0 %v1410, 4
        %v1412 = vpop.permute.xlu0 %1411
        %v1413 = vrot.slane %v1412, 7
        %v1414 = vsel %vm322, %v1413, %v1412
        %v1416 = vmul.f32 %v1381, %v1414
        %1418 = vrot.lane.b32.xlu0 %v1416, 124
        %v1419 = vpop.permute.xlu0 %1418
        %v1420 = vrot.slane %v1419, 1
        %vm1421 = vcmask 1014784
        %v1422 = vsel %vm1421, %v1419, %v1420
        %v1424 = vadd.f32 %v1253, %v1422
        %v1425 = vld [vmem:[#allocation2] ss:$2 sm:$0x7]
        %v1426 = vld [vmem:[%s569] ss:$2 sm:$0x7]
        %s1427 = sld [smem:[#allocation3 + $0x5]]
        %v1428 = vstv %s1427
        %v1429 = vmul.f32 %v1428, %v1425
        %v1430 = vadd.f32 %v1429, 0.0
        %s1431 = sld [smem:[#allocation3 + $0x36]]
        %v1432 = vstv %s1431
        %v1433 = vmul.f32 %v1432, %v1426
        %v1434 = vadd.f32 %v1430, %v1433
        %s1435 = sld [smem:[#allocation3 + $0xc]]
        %v1436 = vstv %s1435
        %v1437 = vmul.f32 %v1436, %v1425
        %1439 = vrot.lane.b32.xlu0 %v1437, 112
        %v1440 = vpop.permute.xlu0 %1439
        %v1441 = vrot.slane %v1440, 1
        %v1442 = vsel %vm617, %v1440, %v1441
        %v1444 = vadd.f32 %v1434, %v1442
        %s1445 = sld [smem:[#allocation3 + $0x3d]]
        %v1446 = vstv %s1445
        %v1447 = vmul.f32 %v1446, %v1426
        %1449 = vrot.lane.b32.xlu0 %v1447, 112
        %v1450 = vpop.permute.xlu0 %1449
        %v1451 = vrot.slane %v1450, 1
        %v1452 = vsel %vm617, %v1450, %v1451
        %v1454 = vadd.f32 %v1444, %v1452
        %s1455 = sld [smem:[#allocation3 + $0x13]]
        %v1456 = vstv %s1455
        %v1457 = vmul.f32 %v1456, %v1425
        %1459 = vrot.lane.b32.xlu0 %v1457, 96
        %v1460 = vpop.permute.xlu0 %1459
        %v1461 = vrot.slane %v1460, 1
        %v1462 = vsel %vm638, %v1460, %v1461
        %v1464 = vadd.f32 %v1454, %v1462
        %s1465 = sld [smem:[#allocation3 + $0x44]]
        %v1466 = vstv %s1465
        %v1467 = vmul.f32 %v1466, %v1426
        %1469 = vrot.lane.b32.xlu0 %v1467, 96
        %v1470 = vpop.permute.xlu0 %1469
        %v1471 = vrot.slane %v1470, 1
        %v1472 = vsel %vm638, %v1470, %v1471
        %v1474 = vadd.f32 %v1464, %v1472
        %s1475 = sld [smem:[#allocation3 + $0x1a]]
        %v1476 = vstv %s1475
        %v1477 = vmul.f32 %v1476, %v1425
        %1479 = vrot.lane.b32.xlu0 %v1477, 80
        %v1480 = vpop.permute.xlu0 %1479
        %v1481 = vrot.slane %v1480, 1
        %v1482 = vsel %vm659, %v1480, %v1481
        %v1484 = vadd.f32 %v1474, %v1482
        %s1485 = sld [smem:[#allocation3 + $0x4b]]
        %v1486 = vstv %s1485
        %v1487 = vmul.f32 %v1486, %v1426
        %1489 = vrot.lane.b32.xlu0 %v1487, 80
        %v1490 = vpop.permute.xlu0 %1489
        %v1491 = vrot.slane %v1490, 1
        %v1492 = vsel %vm659, %v1490, %v1491
        %v1494 = vadd.f32 %v1484, %v1492
        %s1495 = sld [smem:[#allocation3 + $0x21]]
        %v1496 = vstv %s1495
        %v1497 = vmul.f32 %v1496, %v1425
        %1499 = vrot.lane.b32.xlu0 %v1497, 64
        %v1500 = vpop.permute.xlu0 %1499
        %v1501 = vrot.slane %v1500, 1
        %v1502 = vsel %vm680, %v1500, %v1501
        %v1504 = vadd.f32 %v1494, %v1502
        %s1505 = sld [smem:[#allocation3 + $0x52]]
        %v1506 = vstv %s1505
        %v1507 = vmul.f32 %v1506, %v1426
        %1509 = vrot.lane.b32.xlu0 %v1507, 64
        %v1510 = vpop.permute.xlu0 %1509
        %v1511 = vrot.slane %v1510, 1
        %v1512 = vsel %vm680, %v1510, %v1511
        %v1514 = vadd.f32 %v1504, %v1512
        %s1515 = sld [smem:[#allocation3 + $0x28]]
        %v1516 = vstv %s1515
        %v1517 = vmul.f32 %v1516, %v1425
        %1519 = vrot.lane.b32.xlu0 %v1517, 48
        %v1520 = vpop.permute.xlu0 %1519
        %v1521 = vrot.slane %v1520, 1
        %v1522 = vsel %vm701, %v1520, %v1521
        %v1524 = vadd.f32 %v1514, %v1522
        %s1525 = sld [smem:[#allocation3 + $0x59]]
        %v1526 = vstv %s1525
        %v1527 = vmul.f32 %v1526, %v1426
        %1529 = vrot.lane.b32.xlu0 %v1527, 48
        %v1530 = vpop.permute.xlu0 %1529
        %v1531 = vrot.slane %v1530, 1
        %v1532 = vsel %vm701, %v1530, %v1531
        %v1534 = vadd.f32 %v1524, %v1532
        %s1535 = sld [smem:[#allocation3 + $0x2f]]
        %v1536 = vstv %s1535
        %v1537 = vmul.f32 %v1536, %v1425
        %1539 = vrot.lane.b32.xlu0 %v1537, 32
        %v1540 = vpop.permute.xlu0 %1539
        %v1541 = vrot.slane %v1540, 1
        %v1542 = vsel %vm722, %v1540, %v1541
        %v1544 = vadd.f32 %v1534, %v1542
        %s1545 = sld [smem:[#allocation3 + $0x60]]
        %v1546 = vstv %s1545
        %v1547 = vmul.f32 %v1546, %v1426
        %1549 = vrot.lane.b32.xlu0 %v1547, 32
        %v1550 = vpop.permute.xlu0 %1549
        %v1551 = vrot.slane %v1550, 1
        %v1552 = vsel %vm722, %v1550, %v1551
        %v1554 = vadd.f32 %v1544, %v1552
        %v1555 = vadd.s32 %v596, 2
        %v1556 = vadd.s32 %v597, 2
        %vm1557 = vcmp.ge.s32.totalorder %v1555, 0
        %vm1558 = vcmp.ge.s32.totalorder %v1556, 0
        %vm1559 = vcmp.lt.s32.totalorder %v1555, 16
        %vm1560 = vcmp.lt.s32.totalorder %v1556, 16
        %vm1561 = vmand %vm1557, %vm1559
        %vm1562 = vmand %vm1558, %vm1560
        %v1563 = vsel %vm1561, 1, 0
        %v1564 = vsel %vm1562, 1, 0
        %v1565 = vcvt.s32.f32 %v1563
        %v1566 = vcvt.s32.f32 %v1564
        %v1569 = vcombine.low %v1565, %v1566
        %v1571 = vunpack.c.l.s4 1966171168
        %v1572 = vunpack.c.0.s8 %v1571
        %v1573 = vlaneseq
        %v1574 = vshrl.u32 %v1573, 7
        %v1575 = vsub.s32 %v1572, %v1574
        %v1576 = vrot.slane %v1569, %v1575
        %v1578 = vunpack.c.l.s4 1966171168
        %v1579 = vunpack.c.0.s8 %v1578
        %v1580 = vlaneseq
        %v1581 = vshrl.u32 %v1580, 7
        %v1582 = vsub.s32 %v1579, %v1581
        %v1583 = vrot.slane %v1576, %v1582
        %1584 = vrot.lane.b32.xlu0 %v1583, 5
        %v1585 = vpop.permute.xlu0 %1584
        %v1586 = vrot.slane %v1585, 7
        %vm1587 = vcmask 39936
        %v1588 = vsel %vm1587, %v1586, %v1585
        %v1590 = vmul.f32 %v1554, %v1588
        %1592 = vrot.lane.b32.xlu0 %v1590, 123
        %v1593 = vpop.permute.xlu0 %1592
        %v1594 = vrot.slane %v1593, 1
        %vm1595 = vcmask 1006592
        %v1596 = vsel %vm1595, %v1593, %v1594
        %v1598 = vadd.f32 %v1424, %v1596
        %v1599 = vld [vmem:[#allocation2] ss:$2 sm:$0x7]
        %v1600 = vld [vmem:[%s569] ss:$2 sm:$0x7]
        %s1601 = sld [smem:[#allocation3 + $0x6]]
        %v1602 = vstv %s1601
        %v1603 = vmul.f32 %v1602, %v1599
        %v1604 = vadd.f32 %v1603, 0.0
        %s1605 = sld [smem:[#allocation3 + $0x37]]
        %v1606 = vstv %s1605
        %v1607 = vmul.f32 %v1606, %v1600
        %v1608 = vadd.f32 %v1604, %v1607
        %s1609 = sld [smem:[#allocation3 + $0xd]]
        %v1610 = vstv %s1609
        %v1611 = vmul.f32 %v1610, %v1599
        %1613 = vrot.lane.b32.xlu0 %v1611, 112
        %v1614 = vpop.permute.xlu0 %1613
        %v1615 = vrot.slane %v1614, 1
        %v1616 = vsel %vm617, %v1614, %v1615
        %v1618 = vadd.f32 %v1608, %v1616
        %s1619 = sld [smem:[#allocation3 + $0x3e]]
        %v1620 = vstv %s1619
        %v1621 = vmul.f32 %v1620, %v1600
        %1623 = vrot.lane.b32.xlu0 %v1621, 112
        %v1624 = vpop.permute.xlu0 %1623
        %v1625 = vrot.slane %v1624, 1
        %v1626 = vsel %vm617, %v1624, %v1625
        %v1628 = vadd.f32 %v1618, %v1626
        %s1629 = sld [smem:[#allocation3 + $0x14]]
        %v1630 = vstv %s1629
        %v1631 = vmul.f32 %v1630, %v1599
        %1633 = vrot.lane.b32.xlu0 %v1631, 96
        %v1634 = vpop.permute.xlu0 %1633
        %v1635 = vrot.slane %v1634, 1
        %v1636 = vsel %vm638, %v1634, %v1635
        %v1638 = vadd.f32 %v1628, %v1636
        %s1639 = sld [smem:[#allocation3 + $0x45]]
        %v1640 = vstv %s1639
        %v1641 = vmul.f32 %v1640, %v1600
        %1643 = vrot.lane.b32.xlu0 %v1641, 96
        %v1644 = vpop.permute.xlu0 %1643
        %v1645 = vrot.slane %v1644, 1
        %v1646 = vsel %vm638, %v1644, %v1645
        %v1648 = vadd.f32 %v1638, %v1646
        %s1649 = sld [smem:[#allocation3 + $0x1b]]
        %v1650 = vstv %s1649
        %v1651 = vmul.f32 %v1650, %v1599
        %1653 = vrot.lane.b32.xlu0 %v1651, 80
        %v1654 = vpop.permute.xlu0 %1653
        %v1655 = vrot.slane %v1654, 1
        %v1656 = vsel %vm659, %v1654, %v1655
        %v1658 = vadd.f32 %v1648, %v1656
        %s1659 = sld [smem:[#allocation3 + $0x4c]]
        %v1660 = vstv %s1659
        %v1661 = vmul.f32 %v1660, %v1600
        %1663 = vrot.lane.b32.xlu0 %v1661, 80
        %v1664 = vpop.permute.xlu0 %1663
        %v1665 = vrot.slane %v1664, 1
        %v1666 = vsel %vm659, %v1664, %v1665
        %v1668 = vadd.f32 %v1658, %v1666
        %s1669 = sld [smem:[#allocation3 + $0x22]]
        %v1670 = vstv %s1669
        %v1671 = vmul.f32 %v1670, %v1599
        %1673 = vrot.lane.b32.xlu0 %v1671, 64
        %v1674 = vpop.permute.xlu0 %1673
        %v1675 = vrot.slane %v1674, 1
        %v1676 = vsel %vm680, %v1674, %v1675
        %v1678 = vadd.f32 %v1668, %v1676
        %s1679 = sld [smem:[#allocation3 + $0x53]]
        %v1680 = vstv %s1679
        %v1681 = vmul.f32 %v1680, %v1600
        %1683 = vrot.lane.b32.xlu0 %v1681, 64
        %v1684 = vpop.permute.xlu0 %1683
        %v1685 = vrot.slane %v1684, 1
        %v1686 = vsel %vm680, %v1684, %v1685
        %v1688 = vadd.f32 %v1678, %v1686
        %s1689 = sld [smem:[#allocation3 + $0x29]]
        %v1690 = vstv %s1689
        %v1691 = vmul.f32 %v1690, %v1599
        %1693 = vrot.lane.b32.xlu0 %v1691, 48
        %v1694 = vpop.permute.xlu0 %1693
        %v1695 = vrot.slane %v1694, 1
        %v1696 = vsel %vm701, %v1694, %v1695
        %v1698 = vadd.f32 %v1688, %v1696
        %s1699 = sld [smem:[#allocation3 + $0x5a]]
        %v1700 = vstv %s1699
        %v1701 = vmul.f32 %v1700, %v1600
        %1703 = vrot.lane.b32.xlu0 %v1701, 48
        %v1704 = vpop.permute.xlu0 %1703
        %v1705 = vrot.slane %v1704, 1
        %v1706 = vsel %vm701, %v1704, %v1705
        %v1708 = vadd.f32 %v1698, %v1706
        %s1709 = sld [smem:[#allocation3 + $0x30]]
        %v1710 = vstv %s1709
        %v1711 = vmul.f32 %v1710, %v1599
        %1713 = vrot.lane.b32.xlu0 %v1711, 32
        %v1714 = vpop.permute.xlu0 %1713
        %v1715 = vrot.slane %v1714, 1
        %v1716 = vsel %vm722, %v1714, %v1715
        %v1718 = vadd.f32 %v1708, %v1716
        %s1719 = sld [smem:[#allocation3 + $0x61]]
        %v1720 = vstv %s1719
        %v1721 = vmul.f32 %v1720, %v1600
        %1723 = vrot.lane.b32.xlu0 %v1721, 32
        %v1724 = vpop.permute.xlu0 %1723
        %v1725 = vrot.slane %v1724, 1
        %v1726 = vsel %vm722, %v1724, %v1725
        %v1728 = vadd.f32 %v1718, %v1726
        %v1729 = vadd.s32 %v596, 3
        %v1730 = vadd.s32 %v597, 3
        %vm1731 = vcmp.ge.s32.totalorder %v1729, 0
        %vm1732 = vcmp.ge.s32.totalorder %v1730, 0
        %vm1733 = vcmp.lt.s32.totalorder %v1729, 16
        %vm1734 = vcmp.lt.s32.totalorder %v1730, 16
        %vm1735 = vmand %vm1731, %vm1733
        %vm1736 = vmand %vm1732, %vm1734
        %v1737 = vsel %vm1735, 1, 0
        %v1738 = vsel %vm1736, 1, 0
        %v1739 = vcvt.s32.f32 %v1737
        %v1740 = vcvt.s32.f32 %v1738
        %v1743 = vcombine.low %v1739, %v1740
        %v1745 = vunpack.c.l.s4 1966171168
        %v1746 = vunpack.c.0.s8 %v1745
        %v1747 = vlaneseq
        %v1748 = vshrl.u32 %v1747, 7
        %v1749 = vsub.s32 %v1746, %v1748
        %v1750 = vrot.slane %v1743, %v1749
        %v1752 = vunpack.c.l.s4 1966171168
        %v1753 = vunpack.c.0.s8 %v1752
        %v1754 = vlaneseq
        %v1755 = vshrl.u32 %v1754, 7
        %v1756 = vsub.s32 %v1753, %v1755
        %v1757 = vrot.slane %v1750, %v1756
        %1758 = vrot.lane.b32.xlu0 %v1757, 6
        %v1759 = vpop.permute.xlu0 %1758
        %v1760 = vrot.slane %v1759, 7
        %vm1761 = vcmask 48128
        %v1762 = vsel %vm1761, %v1760, %v1759
        %v1764 = vmul.f32 %v1728, %v1762
        %1766 = vrot.lane.b32.xlu0 %v1764, 122
        %v1767 = vpop.permute.xlu0 %1766
        %v1768 = vrot.slane %v1767, 1
        %vm1769 = vcmask 998400
        %v1770 = vsel %vm1769, %v1767, %v1768
        %v1772 = vadd.f32 %v1598, %v1770
        %v1773 = vxor.u32 %v1772, 2147483648
        %v1774 = vmul.f32 %v1773, 1.442695
        %v1775 = vpow.pop %v1774
        %v1776 = vadd.f32 %v1775, 1.0
        %v1777 = vrcp.pop %v1776
        %v1778 = vmul.f32 1.0, %v1777
        %v1779 = vadd.f32 %v311, %v312
        %v1781 = vlaneseq
        %v1782 = vshrl.u32 %v1781, 7
        %v1783 = vsub.s32 0, %v1782
        %v1784 = vrot.slane %v1778, %v1783
        %v1785 = vlaneseq
        %v1786 = vshrl.u32 %v1785, 7
        %v1787 = vsub.s32 1, %v1786
        %v1788 = vrot.slane %v1778, %v1787
        %v1792 = vcombine.high %v1779, %v1779
        %v1794 = vmul.f32 %v1784, %v1779
        %v1795 = vmul.f32 %v1788, %v1792
        %v1798 = vcombine.low %v1794, %v1795
        %1800 = vst [vmem:[%s300] sm:$0xff] %v1798
        %s1801 = sand.u32 %s187, 1
        %s1802 = scalar_lea.sflag [#allocation4], %s1801
        %s1803 = sand.u32 %s187, 1
        %s1804 = smul.addr %s1803, 8
        %s1805 = scalar_lea.vmem [#allocation6], %s1804
        // Predicated region
        $region53: #{tpu_custom_call.1} parent=47 // pred_check
          %p1806 = pneg %p197
        $region54: #{tpu_custom_call.1} parent=47 // pred_check_branch
          %1808 = sbr.rel (%p1806) target = $region56
        $region55: #{tpu_custom_call.1} parent=47 // pred_region
          %s1810 = ssub.s32 128, 128
          %1811 = vsyncadd %s1802, %s1810
          %s1812 = smul.addr %s22, 2
          %s1813 = smul.addr %s1812, 64
          %s1814 = scalar_lea.hbm %s7, %s1813
          %s1816 = sshll.u32 %s1805, 4
          %s1817 = int_to_ptr.vmem [resolvable:$true] %s1816
          %1819 = dma.vmem_to_hbm [thread:$0]  %s1817, 128, %s1814, %s1802
        $region56: #{tpu_custom_call.1} parent=47 // pred_fallthru
          _
      $region48: #{tpu_custom_call.1} parent=5 // pred_fallthru
        _
      %p1820 = scmp.le.s32.totalorder 2, %s17
      // Predicated region
      $region57: #{tpu_custom_call.1} parent=5 // pred_check
        %p1821 = pneg %p1820
      $region58: #{tpu_custom_call.1} parent=5 // pred_check_branch
        %1823 = sbr.rel (%p1821) target = $region60
      $region59: #{tpu_custom_call.1} parent=5 // pred_region
        %s1824 = ssub.s32 %s17, 2
        // Predicated region
        $region61: #{tpu_custom_call.1} parent=59 // pred_check
          %p1825 = pneg %p203
        $region62: #{tpu_custom_call.1} parent=59 // pred_check_branch
          %1827 = sbr.rel (%p1825) target = $region64
        $region63: #{tpu_custom_call.1} parent=59 // pred_region
          %s1828 = sand.u32 %s188, 1
          %s1829 = scalar_lea.sflag [#allocation4], %s1828
          %s1830 = sand.u32 %s188, 1
          %s1831 = smul.addr %s1830, 8
          %s1832 = scalar_lea.vmem [#allocation6], %s1831
          %1833 = dma.done %s1829, 128
        $region64: #{tpu_custom_call.1} parent=59 // pred_fallthru
          _
      $region60: #{tpu_custom_call.1} parent=5 // pred_fallthru
        _
    $region6: #{tpu_custom_call.1} parent=1 // loop_footer
      %s21 = sadd.s32 1, %s17
    $region7: #{tpu_custom_call.1} parent=1 // loop_footer_branch
      %16 = sbr.rel target = $region3
    $region8: #{tpu_custom_call.1} parent=1 // loop_exit
      _
    %1834 = vsyncpa [#allocation4], 1
    %s1835 = scalar_lea.sflag [#allocation4], 1
    %1836 = vsyncpa %s1835, 1
    %1837 = vsyncpa [#allocation5], 1
    %s1838 = scalar_lea.sflag [#allocation5], 1
    %1839 = vsyncpa %s1838, 1

</llo_original>
